<compile_context>
chip_gen: v5e
topology: v5e:2x2
jax: 0.10.0
libtpu: 0.0.40
codegen_flags: <defaults>
</compile_context>

<pallas_src>
import functools

import jax
import jax.numpy as jnp
from jax.experimental import pallas as pl
from jax.experimental.pallas import tpu as pltpu

C_IN = 3
C_STEM = 32
C_HEAD = 64
SE_DIM = 8
NUM_CLASSES = 2
K_STEM = 9 * C_IN            # 27 raw im2col columns for the stem
K_STEM_PAD = 32              # padded to a sublane-friendly MXU contraction dim
LP = 128 // C_STEM           # 4 images packed along the 128-lane axis per grid step
NCP = 128 // LP              # per-image padded classifier columns (32), 4*32 = 128 lanes
LANES = LP * C_STEM          # 128


# ----------------------------------------------------------------------------
# Fused Pallas kernel: one grid step == full forward for LP lane-packed images
# ----------------------------------------------------------------------------

def detector_fused_kernel(a_ref, mask_ref, pool_ref,
                          w_stem_ref, b_stem_ref, w_dw_ref, b_dw_ref,
                          w_se1_ref, b_se1_ref, w_se2_ref, b_se2_ref,
                          w_ph_ref, b_ph_ref, w_fc_ref, b_fc_ref,
                          o_ref, pad_ref, *, np_rows, wo, margin):
    lanes = pad_ref.shape[1]

    # Margins only feed rows that the pooling matrices zero-weight, but they must be
    # finite; zeroing them each step is 2 tiny stores and stays correct when the batch
    # grid axis is sharded across TensorCores.
    pad_ref[0:margin, :] = jnp.zeros((margin, lanes), jnp.float32)
    pad_ref[margin + np_rows:margin + np_rows + margin, :] = (
        jnp.zeros((margin, lanes), jnp.float32))

    # --- stem 3x3 stride-2 conv (im2col matmul over the padded output grid) + swish ---
    a = a_ref[0]                                            # (Np, 128) bf16
    y = jnp.dot(a, w_stem_ref[...], preferred_element_type=jnp.float32)
    y = y + b_stem_ref[...]
    y = y * jax.nn.sigmoid(y)                               # swish, f32 (v5e-safe)
    y = y * mask_ref[...]                                   # zero the 1-pixel padding ring
    pad_ref[margin:margin + np_rows, :] = y                 # single contiguous store

    # --- depthwise 3x3 (pad=1): 9 statically-offset flat row slices, 128 active lanes ---
    w_dw = w_dw_ref[...]                                    # (9, 128) f32
    acc = None
    for k in range(9):                                      # unrolled VPU madds
        dy, dx = divmod(k, 3)
        off = margin + (dy - 1) * (wo + 2) + (dx - 1)
        tap = pad_ref[off:off + np_rows, :] * w_dw[k:k + 1, :]
        acc = tap if acc is None else acc + tap
    acc = acc + b_dw_ref[...]
    acc = acc * jax.nn.sigmoid(acc)
    y1 = acc                                                # (Np, 128) f32 (junk at ring rows)

    # --- squeeze-excite: per-image pool via ones-row MXU matmul -> FC swish -> FC sigmoid ---
    y1b = y1.astype(jnp.bfloat16)
    s = jnp.dot(pool_ref[...], y1b, preferred_element_type=jnp.float32)   # (1, 128)
    h = jnp.dot(s.astype(jnp.bfloat16), w_se1_ref[...],
                preferred_element_type=jnp.float32) + b_se1_ref[...]      # (1, 32)
    h = h * jax.nn.sigmoid(h)
    g = jnp.dot(h.astype(jnp.bfloat16), w_se2_ref[...],
                preferred_element_type=jnp.float32) + b_se2_ref[...]      # (1, 128)
    g = jax.nn.sigmoid(g)
    y2 = y1 * g                                             # per-image channel gate

    # --- folded 1x1 project+head conv (block-diagonal over LP images) + swish ---
    y4 = jnp.dot(y2.astype(jnp.bfloat16), w_ph_ref[...],
                 preferred_element_type=jnp.float32) + b_ph_ref[...]      # (Np, 256)
    y4 = y4 * jax.nn.sigmoid(y4)

    # --- global average pool (ones-row MXU) + padded block-diagonal classifier ---
    pooled = jnp.dot(pool_ref[...], y4.astype(jnp.bfloat16),
                     preferred_element_type=jnp.float32)                  # (1, 256)
    logits = jnp.dot(pooled.astype(jnp.bfloat16), w_fc_ref[...],
                     preferred_element_type=jnp.float32) + b_fc_ref[...]  # (1, 128)
    o_ref[0] = logits.astype(o_ref.dtype)                   # lane-dense (1, 128) store


# ----------------------------------------------------------------------------
# Wrapper
# ----------------------------------------------------------------------------

def _extract_stem_patches_padded(x_nhwc, ksize=3, stride=2, padding=1):
    """NHWC -> (N, ho+2, wo+2, K_STEM_PAD) im2col on the depthwise's padded output grid.

    Runs inside the jitted wrapper so XLA fuses the NCHW->NHWC transpose, pads, strided
    slices and concat; the ring rows are zero patches (their stem output is masked in
    the kernel) so the kernel can write the depthwise buffer with one contiguous store.
    """
    _, h, w, cin = x_nhwc.shape
    xp = jnp.pad(x_nhwc, ((0, 0), (padding, padding), (padding, padding), (0, 0)))
    ho = (h + 2 * padding - ksize) // stride + 1
    wo = (w + 2 * padding - ksize) // stride + 1
    taps = []
    for dy in range(ksize):
        for dx in range(ksize):
            taps.append(xp[:, dy:dy + stride * ho:stride,
                           dx:dx + stride * wo:stride, :])
    p = jnp.concatenate(taps, axis=-1)                                  # (N, ho, wo, 27)
    p = jnp.pad(p, ((0, 0), (0, 0), (0, 0), (0, K_STEM_PAD - 9 * cin)))  # K 27 -> 32
    p = jnp.pad(p, ((0, 0), (1, 1), (1, 1), (0, 0)))                    # 1-pixel ring
    return p, ho, wo


def _fused_forward(a_packed, mask, pool_row, params, np_rows, wo):
    g = a_packed.shape[0]
    margin = 8 * ((wo + 3 + 7) // 8)           # 8-aligned margin >= max tap offset

    kernel = functools.partial(detector_fused_kernel,
                               np_rows=np_rows, wo=wo, margin=margin)

    def full_spec(arr):
        zeros = (0,) * arr.ndim
        return pl.BlockSpec(arr.shape, lambda b, _z=zeros: _z)

    weight_order = ("w_stem", "b_stem", "w_dw", "b_dw", "w_se1", "b_se1",
                    "w_se2", "b_se2", "w_ph", "b_ph", "w_fc", "b_fc")
    weights = [params[name] for name in weight_order]

    return pl.pallas_call(
        kernel,
        out_shape=jax.ShapeDtypeStruct((g, 1, LANES), jnp.float32),
        grid=(g,),
        in_specs=[pl.BlockSpec((1, np_rows, LANES), lambda b: (b, 0, 0)),
                  full_spec(mask), full_spec(pool_row)]
                 + [full_spec(wgt) for wgt in weights],
        out_specs=pl.BlockSpec((1, 1, LANES), lambda b: (b, 0, 0)),
        scratch_shapes=[pltpu.VMEM((np_rows + 2 * margin, LANES), jnp.float32)],
        compiler_params=pltpu.CompilerParams(
            dimension_semantics=("parallel",),
            vmem_limit_bytes=32 * 1024 * 1024),
    )(a_packed, mask, pool_row, *weights)


@jax.jit
def detector_forward(x_nchw, params):
    # layout: NCHW (PyTorch) -> NHWC so channels map to the TPU lane dim.
    x = jnp.transpose(x_nchw, (0, 2, 3, 1)).astype(jnp.float32)
    n = x.shape[0]
    patches, ho, wo = _extract_stem_patches_padded(x, ksize=3, stride=2, padding=1)

    # pad batch to a multiple of LP and pack LP images along the lane axis
    n_pad = -(-n // LP) * LP
    if n_pad != n:
        patches = jnp.pad(patches, ((0, n_pad - n), (0, 0), (0, 0), (0, 0)))
    np_rows = (ho + 2) * (wo + 2)
    g = n_pad // LP
    a = patches.reshape(g, LP, np_rows, K_STEM_PAD)
    a = jnp.transpose(a, (0, 2, 1, 3)).reshape(g, np_rows, LANES).astype(jnp.bfloat16)

    # interior-row mask and 1/hw pooling row (ones-row MXU pooling, masks ring rows)
    m2 = jnp.zeros((ho + 2, wo + 2), jnp.float32).at[1:ho + 1, 1:wo + 1].set(1.0)
    mask = m2.reshape(np_rows, 1)
    pool_row = (m2.reshape(1, np_rows) / float(ho * wo)).astype(jnp.bfloat16)

    out = _fused_forward(a, mask, pool_row, params, np_rows, wo)   # (g, 1, 128)
    logits = out.reshape(g * LP, NCP)                              # unpack lane blocks
    return logits[:n, :NUM_CLASSES]                                # (N, 2) logits


# ----------------------------------------------------------------------------
# Parameters (deterministic synthetic init; proj folded into head, lane-packed)
# ----------------------------------------------------------------------------

def init_params(key):
    ks = jax.random.split(key, 8)
    sc = 0.05
    eye = jnp.eye(LP, dtype=jnp.float32)

    w_stem = jax.random.normal(ks[0], (K_STEM, C_STEM), jnp.float32) * sc
    w_stem = jnp.pad(w_stem, ((0, K_STEM_PAD - K_STEM), (0, 0)))        # (32, 32)
    w_dw = jax.random.normal(ks[1], (9, C_STEM), jnp.float32) * sc
    w_se1 = jax.random.normal(ks[2], (C_STEM, SE_DIM), jnp.float32) * sc
    w_se2 = jax.random.normal(ks[3], (SE_DIM, C_STEM), jnp.float32) * sc
    w_proj = jax.random.normal(ks[4], (C_STEM, C_STEM), jnp.float32) * sc
    w_head = jax.random.normal(ks[5], (C_STEM, C_HEAD), jnp.float32) * sc
    w_fc = jax.random.normal(ks[6], (C_HEAD, NUM_CLASSES), jnp.float32) * sc
    w_fc = jnp.pad(w_fc, ((0, 0), (0, NCP - NUM_CLASSES)))              # (64, 32)

    b_stem = jnp.zeros((1, C_STEM), jnp.float32)
    b_dw = jnp.zeros((1, C_STEM), jnp.float32)
    b_se1 = jnp.zeros((1, SE_DIM), jnp.float32)
    b_se2 = jnp.zeros((1, C_STEM), jnp.float32)
    b_proj = jnp.zeros((1, C_STEM), jnp.float32)
    b_head = jnp.zeros((1, C_HEAD), jnp.float32)
    b_fc = jnp.zeros((1, NCP), jnp.float32)

    # fold the 1x1 project conv into the 1x1 head conv (no nonlinearity between them)
    w_ph = w_proj @ w_head                                   # (32, 64)
    b_ph = b_proj @ w_head + b_head                          # (1, 64)

    # block-diagonal (MXU) / lane-tiled (VPU) copies so LP images share 128 lanes
    bd = lambda w: jnp.kron(eye, w)
    tile = lambda b: jnp.tile(b, (1, LP))
    return {
        "w_stem": bd(w_stem).astype(jnp.bfloat16),           # (128, 128)
        "b_stem": tile(b_stem),                              # (1, 128) f32
        "w_dw": tile(w_dw),                                  # (9, 128) f32 (VPU)
        "b_dw": tile(b_dw),                                  # (1, 128) f32
        "w_se1": bd(w_se1).astype(jnp.bfloat16),             # (128, 32)
        "b_se1": tile(b_se1),                                 # (1, 32) f32
        "w_se2": bd(w_se2).astype(jnp.bfloat16),             # (32, 128)
        "b_se2": tile(b_se2),                                 # (1, 128) f32
        "w_ph": bd(w_ph).astype(jnp.bfloat16),               # (128, 256)
        "b_ph": tile(b_ph),                                   # (1, 256) f32
        "w_fc": bd(w_fc).astype(jnp.bfloat16),               # (256, 128)
        "b_fc": tile(b_fc),                                   # (1, 128) f32
    }


if __name__ == "__main__":
    # small NCHW RGB input consistent with an image classifier; batch 8 -> grid (2,)
    x = jax.random.normal(jax.random.PRNGKey(0), (8, C_IN, 16, 16), jnp.float32)
    params = init_params(jax.random.PRNGKey(1))

    logits = detector_forward(x, params)
    jax.block_until_ready(logits)

    assert logits.shape == (8, NUM_CLASSES), logits.shape
    assert logits.dtype == jnp.float32
    assert bool(jnp.all(jnp.isfinite(logits)))
    print("KERNEL_OK")
</pallas_src>

<mosaic_0001>
module attributes {stable_mosaic.version = 11 : i64} {
  func.func @detector_fused_kernel(%arg0: i32, %arg1: memref<1x100x128xbf16, #tpu.memory_space<vmem>>, %arg2: memref<100x1xf32, #tpu.memory_space<vmem>>, %arg3: memref<1x100xbf16, #tpu.memory_space<vmem>>, %arg4: memref<128x128xbf16, #tpu.memory_space<vmem>>, %arg5: memref<1x128xf32, #tpu.memory_space<vmem>>, %arg6: memref<9x128xf32, #tpu.memory_space<vmem>>, %arg7: memref<1x128xf32, #tpu.memory_space<vmem>>, %arg8: memref<128x32xbf16, #tpu.memory_space<vmem>>, %arg9: memref<1x32xf32, #tpu.memory_space<vmem>>, %arg10: memref<32x128xbf16, #tpu.memory_space<vmem>>, %arg11: memref<1x128xf32, #tpu.memory_space<vmem>>, %arg12: memref<128x256xbf16, #tpu.memory_space<vmem>>, %arg13: memref<1x256xf32, #tpu.memory_space<vmem>>, %arg14: memref<256x128xbf16, #tpu.memory_space<vmem>>, %arg15: memref<1x128xf32, #tpu.memory_space<vmem>>, %arg16: memref<1x1x128xf32, #tpu.memory_space<vmem>>, %arg17: memref<132x128xf32, #tpu.memory_space<vmem>>) attributes {dimension_semantics = [#tpu.dimension_semantics<parallel>], iteration_bounds = array<i64: 2>, scalar_prefetch = 0 : i64, scratch_operands = 1 : i64, tpu.core_type = #tpu.core_type<tc>, window_params = [{transform_indices = @transform_0, window_bounds = array<i64: 1, 100, 128>}, {pipeline_mode = #tpu.pipeline_mode<synchronous>, transform_indices = @transform_1, window_bounds = array<i64: 100, 1>}, {pipeline_mode = #tpu.pipeline_mode<synchronous>, transform_indices = @transform_2, window_bounds = array<i64: 1, 100>}, {pipeline_mode = #tpu.pipeline_mode<synchronous>, transform_indices = @transform_3, window_bounds = array<i64: 128, 128>}, {pipeline_mode = #tpu.pipeline_mode<synchronous>, transform_indices = @transform_4, window_bounds = array<i64: 1, 128>}, {pipeline_mode = #tpu.pipeline_mode<synchronous>, transform_indices = @transform_5, window_bounds = array<i64: 9, 128>}, {pipeline_mode = #tpu.pipeline_mode<synchronous>, transform_indices = @transform_6, window_bounds = array<i64: 1, 128>}, {pipeline_mode = #tpu.pipeline_mode<synchronous>, transform_indices = @transform_7, window_bounds = array<i64: 128, 32>}, {pipeline_mode = #tpu.pipeline_mode<synchronous>, transform_indices = @transform_8, window_bounds = array<i64: 1, 32>}, {pipeline_mode = #tpu.pipeline_mode<synchronous>, transform_indices = @transform_9, window_bounds = array<i64: 32, 128>}, {pipeline_mode = #tpu.pipeline_mode<synchronous>, transform_indices = @transform_10, window_bounds = array<i64: 1, 128>}, {pipeline_mode = #tpu.pipeline_mode<synchronous>, transform_indices = @transform_11, window_bounds = array<i64: 128, 256>}, {pipeline_mode = #tpu.pipeline_mode<synchronous>, transform_indices = @transform_12, window_bounds = array<i64: 1, 256>}, {pipeline_mode = #tpu.pipeline_mode<synchronous>, transform_indices = @transform_13, window_bounds = array<i64: 256, 128>}, {pipeline_mode = #tpu.pipeline_mode<synchronous>, transform_indices = @transform_14, window_bounds = array<i64: 1, 128>}, {transform_indices = @transform_15, window_bounds = array<i64: 1, 1, 128>}]} {
    %cst = arith.constant 0.000000e+00 : f32
    %0 = vector.broadcast %cst : f32 to vector<16x128xf32>
    %c0 = arith.constant 0 : index
    %c0_0 = arith.constant 0 : index
    %1 = vector.load %arg17[%c0, %c0_0] : memref<132x128xf32, #tpu.memory_space<vmem>>, vector<16x128xf32>
    tpu.vector_store %arg17[%c0, %c0_0], %0 {strides = array<i32>} : memref<132x128xf32, #tpu.memory_space<vmem>>, vector<16x128xf32>,
    %cst_1 = arith.constant 0.000000e+00 : f32
    %2 = vector.broadcast %cst_1 : f32 to vector<16x128xf32>
    %c116 = arith.constant 116 : index
    %c0_2 = arith.constant 0 : index
    %3 = vector.load %arg17[%c116, %c0_2] : memref<132x128xf32, #tpu.memory_space<vmem>>, vector<16x128xf32>
    tpu.vector_store %arg17[%c116, %c0_2], %2 {strides = array<i32>} : memref<132x128xf32, #tpu.memory_space<vmem>>, vector<16x128xf32>,
    %c0_3 = arith.constant 0 : index
    %c0_4 = arith.constant 0 : index
    %c0_5 = arith.constant 0 : index
    %4 = vector.load %arg1[%c0_3, %c0_4, %c0_5] : memref<1x100x128xbf16, #tpu.memory_space<vmem>>, vector<1x100x128xbf16>
    %5 = vector.shape_cast %4 : vector<1x100x128xbf16> to vector<100x128xbf16>
    %c0_6 = arith.constant 0 : index
    %c0_7 = arith.constant 0 : index
    %6 = vector.load %arg4[%c0_6, %c0_7] : memref<128x128xbf16, #tpu.memory_space<vmem>>, vector<128x128xbf16>
    %cst_8 = arith.constant dense<0.000000e+00> : vector<100x128xf32>
    %7 = tpu.matmul %5, %6, %cst_8 {dimension_numbers = #tpu.dot_dimension_numbers<[1], [0], [0], [1], [0, 0, 1, 1], [], []>} : vector<100x128xbf16>, vector<128x128xbf16>, vector<100x128xf32> -> vector<100x128xf32>
    %c0_9 = arith.constant 0 : index
    %c0_10 = arith.constant 0 : index
    %8 = vector.load %arg5[%c0_9, %c0_10] : memref<1x128xf32, #tpu.memory_space<vmem>>, vector<1x128xf32>
    %9 = vector.broadcast %8 : vector<1x128xf32> to vector<100x128xf32>
    %10 = arith.addf %7, %9 : vector<100x128xf32>
    %11 = arith.negf %10 : vector<100x128xf32>
    %12 = math.exp %11 : vector<100x128xf32>
    %cst_11 = arith.constant 1.000000e+00 : f32
    %13 = vector.broadcast %cst_11 : f32 to vector<100x128xf32>
    %14 = arith.addf %13, %12 : vector<100x128xf32>
    %15 = arith.divf %13, %14 : vector<100x128xf32>
    %16 = arith.mulf %10, %15 : vector<100x128xf32>
    %c0_12 = arith.constant 0 : index
    %c0_13 = arith.constant 0 : index
    %17 = vector.load %arg2[%c0_12, %c0_13] : memref<100x1xf32, #tpu.memory_space<vmem>>, vector<100x1xf32>
    %18 = vector.broadcast %17 : vector<100x1xf32> to vector<100x128xf32>
    %19 = arith.mulf %16, %18 : vector<100x128xf32>
    %c16 = arith.constant 16 : index
    %c0_14 = arith.constant 0 : index
    %20 = vector.load %arg17[%c16, %c0_14] : memref<132x128xf32, #tpu.memory_space<vmem>>, vector<100x128xf32>
    tpu.vector_store %arg17[%c16, %c0_14], %19 {strides = array<i32>} : memref<132x128xf32, #tpu.memory_space<vmem>>, vector<100x128xf32>,
    %c0_15 = arith.constant 0 : index
    %c0_16 = arith.constant 0 : index
    %21 = vector.load %arg6[%c0_15, %c0_16] : memref<9x128xf32, #tpu.memory_space<vmem>>, vector<9x128xf32>
    %c5 = arith.constant 5 : index
    %c0_17 = arith.constant 0 : index
    %22 = vector.load %arg17[%c5, %c0_17] : memref<132x128xf32, #tpu.memory_space<vmem>>, vector<100x128xf32>
    %23 = vector.extract_strided_slice %21 {offsets = [0, 0], sizes = [1, 128], strides = [1, 1]} : vector<9x128xf32> to vector<1x128xf32>
    %24 = vector.broadcast %23 : vector<1x128xf32> to vector<100x128xf32>
    %25 = arith.mulf %22, %24 : vector<100x128xf32>
    %c6 = arith.constant 6 : index
    %c0_18 = arith.constant 0 : index
    %26 = vector.load %arg17[%c6, %c0_18] : memref<132x128xf32, #tpu.memory_space<vmem>>, vector<100x128xf32>
    %27 = vector.extract_strided_slice %21 {offsets = [1, 0], sizes = [1, 128], strides = [1, 1]} : vector<9x128xf32> to vector<1x128xf32>
    %28 = vector.broadcast %27 : vector<1x128xf32> to vector<100x128xf32>
    %29 = arith.mulf %26, %28 : vector<100x128xf32>
    %30 = arith.addf %25, %29 : vector<100x128xf32>
    %c7 = arith.constant 7 : index
    %c0_19 = arith.constant 0 : index
    %31 = vector.load %arg17[%c7, %c0_19] : memref<132x128xf32, #tpu.memory_space<vmem>>, vector<100x128xf32>
    %32 = vector.extract_strided_slice %21 {offsets = [2, 0], sizes = [1, 128], strides = [1, 1]} : vector<9x128xf32> to vector<1x128xf32>
    %33 = vector.broadcast %32 : vector<1x128xf32> to vector<100x128xf32>
    %34 = arith.mulf %31, %33 : vector<100x128xf32>
    %35 = arith.addf %30, %34 : vector<100x128xf32>
    %c15 = arith.constant 15 : index
    %c0_20 = arith.constant 0 : index
    %36 = vector.load %arg17[%c15, %c0_20] : memref<132x128xf32, #tpu.memory_space<vmem>>, vector<100x128xf32>
    %37 = vector.extract_strided_slice %21 {offsets = [3, 0], sizes = [1, 128], strides = [1, 1]} : vector<9x128xf32> to vector<1x128xf32>
    %38 = vector.broadcast %37 : vector<1x128xf32> to vector<100x128xf32>
    %39 = arith.mulf %36, %38 : vector<100x128xf32>
    %40 = arith.addf %35, %39 : vector<100x128xf32>
    %c16_21 = arith.constant 16 : index
    %c0_22 = arith.constant 0 : index
    %41 = vector.load %arg17[%c16_21, %c0_22] : memref<132x128xf32, #tpu.memory_space<vmem>>, vector<100x128xf32>
    %42 = vector.extract_strided_slice %21 {offsets = [4, 0], sizes = [1, 128], strides = [1, 1]} : vector<9x128xf32> to vector<1x128xf32>
    %43 = vector.broadcast %42 : vector<1x128xf32> to vector<100x128xf32>
    %44 = arith.mulf %41, %43 : vector<100x128xf32>
    %45 = arith.addf %40, %44 : vector<100x128xf32>
    %c17 = arith.constant 17 : index
    %c0_23 = arith.constant 0 : index
    %46 = vector.load %arg17[%c17, %c0_23] : memref<132x128xf32, #tpu.memory_space<vmem>>, vector<100x128xf32>
    %47 = vector.extract_strided_slice %21 {offsets = [5, 0], sizes = [1, 128], strides = [1, 1]} : vector<9x128xf32> to vector<1x128xf32>
    %48 = vector.broadcast %47 : vector<1x128xf32> to vector<100x128xf32>
    %49 = arith.mulf %46, %48 : vector<100x128xf32>
    %50 = arith.addf %45, %49 : vector<100x128xf32>
    %c25 = arith.constant 25 : index
    %c0_24 = arith.constant 0 : index
    %51 = vector.load %arg17[%c25, %c0_24] : memref<132x128xf32, #tpu.memory_space<vmem>>, vector<100x128xf32>
    %52 = vector.extract_strided_slice %21 {offsets = [6, 0], sizes = [1, 128], strides = [1, 1]} : vector<9x128xf32> to vector<1x128xf32>
    %53 = vector.broadcast %52 : vector<1x128xf32> to vector<100x128xf32>
    %54 = arith.mulf %51, %53 : vector<100x128xf32>
    %55 = arith.addf %50, %54 : vector<100x128xf32>
    %c26 = arith.constant 26 : index
    %c0_25 = arith.constant 0 : index
    %56 = vector.load %arg17[%c26, %c0_25] : memref<132x128xf32, #tpu.memory_space<vmem>>, vector<100x128xf32>
    %57 = vector.extract_strided_slice %21 {offsets = [7, 0], sizes = [1, 128], strides = [1, 1]} : vector<9x128xf32> to vector<1x128xf32>
    %58 = vector.broadcast %57 : vector<1x128xf32> to vector<100x128xf32>
    %59 = arith.mulf %56, %58 : vector<100x128xf32>
    %60 = arith.addf %55, %59 : vector<100x128xf32>
    %c27 = arith.constant 27 : index
    %c0_26 = arith.constant 0 : index
    %61 = vector.load %arg17[%c27, %c0_26] : memref<132x128xf32, #tpu.memory_space<vmem>>, vector<100x128xf32>
    %62 = vector.extract_strided_slice %21 {offsets = [8, 0], sizes = [1, 128], strides = [1, 1]} : vector<9x128xf32> to vector<1x128xf32>
    %63 = vector.broadcast %62 : vector<1x128xf32> to vector<100x128xf32>
    %64 = arith.mulf %61, %63 : vector<100x128xf32>
    %65 = arith.addf %60, %64 : vector<100x128xf32>
    %c0_27 = arith.constant 0 : index
    %c0_28 = arith.constant 0 : index
    %66 = vector.load %arg7[%c0_27, %c0_28] : memref<1x128xf32, #tpu.memory_space<vmem>>, vector<1x128xf32>
    %67 = vector.broadcast %66 : vector<1x128xf32> to vector<100x128xf32>
    %68 = arith.addf %65, %67 : vector<100x128xf32>
    %69 = arith.negf %68 : vector<100x128xf32>
    %70 = math.exp %69 : vector<100x128xf32>
    %cst_29 = arith.constant 1.000000e+00 : f32
    %71 = vector.broadcast %cst_29 : f32 to vector<100x128xf32>
    %72 = arith.addf %71, %70 : vector<100x128xf32>
    %73 = arith.divf %71, %72 : vector<100x128xf32>
    %74 = arith.mulf %68, %73 : vector<100x128xf32>
    %75 = arith.truncf %74 : vector<100x128xf32> to vector<100x128xbf16>
    %c0_30 = arith.constant 0 : index
    %c0_31 = arith.constant 0 : index
    %76 = vector.load %arg3[%c0_30, %c0_31] : memref<1x100xbf16, #tpu.memory_space<vmem>>, vector<1x100xbf16>
    %cst_32 = arith.constant dense<0.000000e+00> : vector<1x128xf32>
    %77 = tpu.matmul %76, %75, %cst_32 {dimension_numbers = #tpu.dot_dimension_numbers<[1], [0], [0], [1], [0, 0, 1, 1], [], []>} : vector<1x100xbf16>, vector<100x128xbf16>, vector<1x128xf32> -> vector<1x128xf32>
    %78 = arith.truncf %77 : vector<1x128xf32> to vector<1x128xbf16>
    %c0_33 = arith.constant 0 : index
    %c0_34 = arith.constant 0 : index
    %79 = vector.load %arg8[%c0_33, %c0_34] : memref<128x32xbf16, #tpu.memory_space<vmem>>, vector<128x32xbf16>
    %cst_35 = arith.constant dense<0.000000e+00> : vector<1x32xf32>
    %80 = tpu.matmul %78, %79, %cst_35 {dimension_numbers = #tpu.dot_dimension_numbers<[1], [0], [0], [1], [0, 0, 1, 1], [], []>} : vector<1x128xbf16>, vector<128x32xbf16>, vector<1x32xf32> -> vector<1x32xf32>
    %c0_36 = arith.constant 0 : index
    %c0_37 = arith.constant 0 : index
    %81 = vector.load %arg9[%c0_36, %c0_37] : memref<1x32xf32, #tpu.memory_space<vmem>>, vector<1x32xf32>
    %82 = arith.addf %80, %81 : vector<1x32xf32>
    %83 = arith.negf %82 : vector<1x32xf32>
    %84 = math.exp %83 : vector<1x32xf32>
    %cst_38 = arith.constant 1.000000e+00 : f32
    %85 = vector.broadcast %cst_38 : f32 to vector<1x32xf32>
    %86 = arith.addf %85, %84 : vector<1x32xf32>
    %87 = arith.divf %85, %86 : vector<1x32xf32>
    %88 = arith.mulf %82, %87 : vector<1x32xf32>
    %89 = arith.truncf %88 : vector<1x32xf32> to vector<1x32xbf16>
    %c0_39 = arith.constant 0 : index
    %c0_40 = arith.constant 0 : index
    %90 = vector.load %arg10[%c0_39, %c0_40] : memref<32x128xbf16, #tpu.memory_space<vmem>>, vector<32x128xbf16>
    %cst_41 = arith.constant dense<0.000000e+00> : vector<1x128xf32>
    %91 = tpu.matmul %89, %90, %cst_41 {dimension_numbers = #tpu.dot_dimension_numbers<[1], [0], [0], [1], [0, 0, 1, 1], [], []>} : vector<1x32xbf16>, vector<32x128xbf16>, vector<1x128xf32> -> vector<1x128xf32>
    %c0_42 = arith.constant 0 : index
    %c0_43 = arith.constant 0 : index
    %92 = vector.load %arg11[%c0_42, %c0_43] : memref<1x128xf32, #tpu.memory_space<vmem>>, vector<1x128xf32>
    %93 = arith.addf %91, %92 : vector<1x128xf32>
    %94 = arith.negf %93 : vector<1x128xf32>
    %95 = math.exp %94 : vector<1x128xf32>
    %cst_44 = arith.constant 1.000000e+00 : f32
    %96 = vector.broadcast %cst_44 : f32 to vector<1x128xf32>
    %97 = arith.addf %96, %95 : vector<1x128xf32>
    %98 = arith.divf %96, %97 : vector<1x128xf32>
    %99 = vector.broadcast %98 : vector<1x128xf32> to vector<100x128xf32>
    %100 = arith.mulf %74, %99 : vector<100x128xf32>
    %101 = arith.truncf %100 : vector<100x128xf32> to vector<100x128xbf16>
    %c0_45 = arith.constant 0 : index
    %c0_46 = arith.constant 0 : index
    %102 = vector.load %arg12[%c0_45, %c0_46] : memref<128x256xbf16, #tpu.memory_space<vmem>>, vector<128x256xbf16>
    %cst_47 = arith.constant dense<0.000000e+00> : vector<100x256xf32>
    %103 = tpu.matmul %101, %102, %cst_47 {dimension_numbers = #tpu.dot_dimension_numbers<[1], [0], [0], [1], [0, 0, 1, 1], [], []>} : vector<100x128xbf16>, vector<128x256xbf16>, vector<100x256xf32> -> vector<100x256xf32>
    %c0_48 = arith.constant 0 : index
    %c0_49 = arith.constant 0 : index
    %104 = vector.load %arg13[%c0_48, %c0_49] : memref<1x256xf32, #tpu.memory_space<vmem>>, vector<1x256xf32>
    %105 = vector.broadcast %104 : vector<1x256xf32> to vector<100x256xf32>
    %106 = arith.addf %103, %105 : vector<100x256xf32>
    %107 = arith.negf %106 : vector<100x256xf32>
    %108 = math.exp %107 : vector<100x256xf32>
    %cst_50 = arith.constant 1.000000e+00 : f32
    %109 = vector.broadcast %cst_50 : f32 to vector<100x256xf32>
    %110 = arith.addf %109, %108 : vector<100x256xf32>
    %111 = arith.divf %109, %110 : vector<100x256xf32>
    %112 = arith.mulf %106, %111 : vector<100x256xf32>
    %c0_51 = arith.constant 0 : index
    %c0_52 = arith.constant 0 : index
    %113 = vector.load %arg3[%c0_51, %c0_52] : memref<1x100xbf16, #tpu.memory_space<vmem>>, vector<1x100xbf16>
    %114 = arith.truncf %112 : vector<100x256xf32> to vector<100x256xbf16>
    %cst_53 = arith.constant dense<0.000000e+00> : vector<1x256xf32>
    %115 = tpu.matmul %113, %114, %cst_53 {dimension_numbers = #tpu.dot_dimension_numbers<[1], [0], [0], [1], [0, 0, 1, 1], [], []>} : vector<1x100xbf16>, vector<100x256xbf16>, vector<1x256xf32> -> vector<1x256xf32>
    %116 = arith.truncf %115 : vector<1x256xf32> to vector<1x256xbf16>
    %c0_54 = arith.constant 0 : index
    %c0_55 = arith.constant 0 : index
    %117 = vector.load %arg14[%c0_54, %c0_55] : memref<256x128xbf16, #tpu.memory_space<vmem>>, vector<256x128xbf16>
    %cst_56 = arith.constant dense<0.000000e+00> : vector<1x128xf32>
    %118 = tpu.matmul %116, %117, %cst_56 {dimension_numbers = #tpu.dot_dimension_numbers<[1], [0], [0], [1], [0, 0, 1, 1], [], []>} : vector<1x256xbf16>, vector<256x128xbf16>, vector<1x128xf32> -> vector<1x128xf32>
    %c0_57 = arith.constant 0 : index
    %c0_58 = arith.constant 0 : index
    %119 = vector.load %arg15[%c0_57, %c0_58] : memref<1x128xf32, #tpu.memory_space<vmem>>, vector<1x128xf32>
    %120 = arith.addf %118, %119 : vector<1x128xf32>
    %c0_59 = arith.constant 0 : index
    %c0_60 = arith.constant 0 : index
    %c0_61 = arith.constant 0 : index
    %121 = vector.load %arg16[%c0_59, %c0_60, %c0_61] : memref<1x1x128xf32, #tpu.memory_space<vmem>>, vector<1x1x128xf32>
    %122 = vector.shape_cast %121 : vector<1x1x128xf32> to vector<1x128xf32>
    %123 = vector.shape_cast %120 : vector<1x128xf32> to vector<1x1x128xf32>
    tpu.vector_store %arg16[%c0_59, %c0_60, %c0_61], %123 {strides = array<i32>} : memref<1x1x128xf32, #tpu.memory_space<vmem>>, vector<1x1x128xf32>,
    return
  }
  func.func @transform_0(%arg0: i32) -> (i32, i32, i32) {
    %c0_i32 = arith.constant 0 : i32
    %c0_i32_0 = arith.constant 0 : i32
    %c0_i32_1 = arith.constant 0 : i32
    return %arg0, %c0_i32, %c0_i32_0 : i32, i32, i32
  }
  func.func @transform_1(%arg0: i32) -> (i32, i32) {
    %c0_i32 = arith.constant 0 : i32
    %c0_i32_0 = arith.constant 0 : i32
    %c0_i32_1 = arith.constant 0 : i32
    return %c0_i32, %c0_i32_0 : i32, i32
  }
  func.func @transform_2(%arg0: i32) -> (i32, i32) {
    %c0_i32 = arith.constant 0 : i32
    %c0_i32_0 = arith.constant 0 : i32
    %c0_i32_1 = arith.constant 0 : i32
    return %c0_i32, %c0_i32_0 : i32, i32
  }
  func.func @transform_3(%arg0: i32) -> (i32, i32) {
    %c0_i32 = arith.constant 0 : i32
    %c0_i32_0 = arith.constant 0 : i32
    %c0_i32_1 = arith.constant 0 : i32
    return %c0_i32, %c0_i32_0 : i32, i32
  }
  func.func @transform_4(%arg0: i32) -> (i32, i32) {
    %c0_i32 = arith.constant 0 : i32
    %c0_i32_0 = arith.constant 0 : i32
    %c0_i32_1 = arith.constant 0 : i32
    return %c0_i32, %c0_i32_0 : i32, i32
  }
  func.func @transform_5(%arg0: i32) -> (i32, i32) {
    %c0_i32 = arith.constant 0 : i32
    %c0_i32_0 = arith.constant 0 : i32
    %c0_i32_1 = arith.constant 0 : i32
    return %c0_i32, %c0_i32_0 : i32, i32
  }
  func.func @transform_6(%arg0: i32) -> (i32, i32) {
    %c0_i32 = arith.constant 0 : i32
    %c0_i32_0 = arith.constant 0 : i32
    %c0_i32_1 = arith.constant 0 : i32
    return %c0_i32, %c0_i32_0 : i32, i32
  }
  func.func @transform_7(%arg0: i32) -> (i32, i32) {
    %c0_i32 = arith.constant 0 : i32
    %c0_i32_0 = arith.constant 0 : i32
    %c0_i32_1 = arith.constant 0 : i32
    return %c0_i32, %c0_i32_0 : i32, i32
  }
  func.func @transform_8(%arg0: i32) -> (i32, i32) {
    %c0_i32 = arith.constant 0 : i32
    %c0_i32_0 = arith.constant 0 : i32
    %c0_i32_1 = arith.constant 0 : i32
    return %c0_i32, %c0_i32_0 : i32, i32
  }
  func.func @transform_9(%arg0: i32) -> (i32, i32) {
    %c0_i32 = arith.constant 0 : i32
    %c0_i32_0 = arith.constant 0 : i32
    %c0_i32_1 = arith.constant 0 : i32
    return %c0_i32, %c0_i32_0 : i32, i32
  }
  func.func @transform_10(%arg0: i32) -> (i32, i32) {
    %c0_i32 = arith.constant 0 : i32
    %c0_i32_0 = arith.constant 0 : i32
    %c0_i32_1 = arith.constant 0 : i32
    return %c0_i32, %c0_i32_0 : i32, i32
  }
  func.func @transform_11(%arg0: i32) -> (i32, i32) {
    %c0_i32 = arith.constant 0 : i32
    %c0_i32_0 = arith.constant 0 : i32
    %c0_i32_1 = arith.constant 0 : i32
    return %c0_i32, %c0_i32_0 : i32, i32
  }
  func.func @transform_12(%arg0: i32) -> (i32, i32) {
    %c0_i32 = arith.constant 0 : i32
    %c0_i32_0 = arith.constant 0 : i32
    %c0_i32_1 = arith.constant 0 : i32
    return %c0_i32, %c0_i32_0 : i32, i32
  }
  func.func @transform_13(%arg0: i32) -> (i32, i32) {
    %c0_i32 = arith.constant 0 : i32
    %c0_i32_0 = arith.constant 0 : i32
    %c0_i32_1 = arith.constant 0 : i32
    return %c0_i32, %c0_i32_0 : i32, i32
  }
  func.func @transform_14(%arg0: i32) -> (i32, i32) {
    %c0_i32 = arith.constant 0 : i32
    %c0_i32_0 = arith.constant 0 : i32
    %c0_i32_1 = arith.constant 0 : i32
    return %c0_i32, %c0_i32_0 : i32, i32
  }
  func.func @transform_15(%arg0: i32) -> (i32, i32, i32) {
    %c0_i32 = arith.constant 0 : i32
    %c0_i32_0 = arith.constant 0 : i32
    %c0_i32_1 = arith.constant 0 : i32
    return %arg0, %c0_i32, %c0_i32_0 : i32, i32, i32
  }
}

</mosaic_0001>

<llo_original>
// kernel: detector_forward.1
$region0: #{detector_forward.1}
  #allocation0 [shape = 'u32[]', space=smem, size = 0x4, offset = 0x4, fixed_abs, tag = 'smem constant byte address 0x4 - core index']
  #allocation1 [shape = 'u32[72,128]{1,0:T(1,128)}', space=vmem, size = 0x9000, scoped, tag = 'internal scratch']
  #allocation2 [shape = 'f32[132,128]{1,0:T(8,128)}', space=vmem, size = 0x11000, scoped, tag = 'scratch operand']
  %s0 = inlined_call_operand.vmem [shape: bf16[2,100,128], index: 0, kind: input, shape index: {}]
  %s1 = inlined_call_operand.vmem [shape: f32[100,1], index: 1, kind: input, shape index: {}]
  %s2 = inlined_call_operand.vmem [shape: bf16[1,100], index: 2, kind: input, shape index: {}]
  %s3 = inlined_call_operand.vmem [shape: bf16[128,128], index: 3, kind: input, shape index: {}]
  %s4 = inlined_call_operand.vmem [shape: f32[1,128], index: 4, kind: input, shape index: {}]
  %s5 = inlined_call_operand.vmem [shape: f32[9,128], index: 5, kind: input, shape index: {}]
  %s6 = inlined_call_operand.vmem [shape: f32[1,128], index: 6, kind: input, shape index: {}]
  %s7 = inlined_call_operand.vmem [shape: bf16[128,32], index: 7, kind: input, shape index: {}]
  %s8 = inlined_call_operand.vmem [shape: f32[1,32], index: 8, kind: input, shape index: {}]
  %s9 = inlined_call_operand.vmem [shape: bf16[32,128], index: 9, kind: input, shape index: {}]
  %s10 = inlined_call_operand.vmem [shape: f32[1,128], index: 10, kind: input, shape index: {}]
  %s11 = inlined_call_operand.vmem [shape: bf16[128,256], index: 11, kind: input, shape index: {}]
  %s12 = inlined_call_operand.vmem [shape: f32[1,256], index: 12, kind: input, shape index: {}]
  %s13 = inlined_call_operand.vmem [shape: bf16[256,128], index: 13, kind: input, shape index: {}]
  %s14 = inlined_call_operand.vmem [shape: f32[1,128], index: 14, kind: input, shape index: {}]
  %s15 = inlined_call_operand.vmem [shape: f32[2,1,128], index: 15, kind: output, shape index: {}]
  %s16 = sld [smem:[#allocation0]]
  $region93: #{detector_forward.1} parent=0
    _
  %s18 = ssub.s32 1, %s16
  %s19 = scalar_select 0, %s18, %s16
  loop: start=0, step=1, limit=4
  $region2: #{detector_forward.1} parent=0 // loop_pre_header
    _
  $region3: #{detector_forward.1} parent=0 // loop_header
    %s21 = sphi 0, %s25
    %p22 = scmp.ge.s32.totalorder %s21, 4
    %s31 = sphi 0, %s33
    %s34 = sphi 0, %s31
    %s35 = sphi 0, %s34
    %s51 = sphi 0, %s35
    %s55 = sphi 0, %s55
    %s57 = sphi 0, %s55
    %s58 = sphi 0, %s57
    %s72 = sphi 0, %s58
    %s76 = sphi 0, %s76
    %s78 = sphi 0, %s76
    %s79 = sphi 0, %s78
    %s93 = sphi 0, %s79
    %s97 = sphi 0, %s97
    %s99 = sphi 0, %s97
    %s100 = sphi 0, %s99
    %s114 = sphi 0, %s100
    %s118 = sphi 0, %s118
    %s120 = sphi 0, %s118
    %s121 = sphi 0, %s120
    %s135 = sphi 0, %s121
    %s139 = sphi 0, %s139
    %s141 = sphi 0, %s139
    %s142 = sphi 0, %s141
    %s156 = sphi 0, %s142
    %s160 = sphi 0, %s160
    %s162 = sphi 0, %s160
    %s163 = sphi 0, %s162
    %s177 = sphi 0, %s163
    %s181 = sphi 0, %s181
    %s183 = sphi 0, %s181
    %s184 = sphi 0, %s183
    %s198 = sphi 0, %s184
    %s202 = sphi 0, %s202
    %s204 = sphi 0, %s202
    %s205 = sphi 0, %s204
    %s219 = sphi 0, %s205
    %s223 = sphi 0, %s223
    %s225 = sphi 0, %s223
    %s226 = sphi 0, %s225
    %s240 = sphi 0, %s226
    %s244 = sphi 0, %s244
    %s246 = sphi 0, %s244
    %s247 = sphi 0, %s246
    %s261 = sphi 0, %s247
    %s265 = sphi 0, %s265
    %s267 = sphi 0, %s265
    %s268 = sphi 0, %s267
    %s282 = sphi 0, %s268
    %s286 = sphi 0, %s286
    %s288 = sphi 0, %s286
    %s289 = sphi 0, %s288
    %s303 = sphi 0, %s289
    %s307 = sphi 0, %s307
    %s309 = sphi 0, %s307
    %s310 = sphi 0, %s309
    %s324 = sphi 0, %s310
    %s328 = sphi 0, %s328
    %s330 = sphi 0, %s328
    %s331 = sphi 0, %s330
    %s345 = sphi 0, %s331
    %s351 = sphi 0, %s353
    %s354 = sphi 0, %s351
    %s355 = sphi 0, %s354
    %s371 = sphi 0, %s355
  $region4: #{detector_forward.1} parent=0 // loop_header_branch
    %24 = sbr.rel (%p22) target = $region8
  $region5: #{detector_forward.1} parent=0 // loop_body
    %s26 = ssub.s32 %s21, 1
    %s27 = ssub.s32 %s21, 2
    %s28 = sadd.s32 %s21, 1
    %s29 = ssub.s32 %s21, %s28
    %p30 = scmp.eq.s32.totalorder %s29, 0
    %s32 = sadd.s32 %s31, 1
    %s33 = scalar_select %p30, %s31, %s32
    %p36 = pneg %p30
    %p37 = scmp.eq.s32.totalorder %s21, 1
    %p38 = por %p36, %p37
    %p39 = scmp.ne.s32.totalorder %s31, %s34
    %p40 = scmp.eq.s32.totalorder %s21, 0
    %p41 = por %p39, %p40
    %p42 = scmp.ne.s32.totalorder %s31, %s34
    %p43 = scmp.eq.s32.totalorder %s26, 1
    %p44 = por %p42, %p43
    %p45 = scmp.ne.s32.totalorder %s34, %s35
    %p46 = scmp.eq.s32.totalorder %s26, 0
    %p47 = por %p45, %p46
    %p48 = scmp.ne.s32.totalorder %s34, %s35
    %p49 = scmp.eq.s32.totalorder %s27, 1
    %p50 = por %p48, %p49
    %p52 = scmp.ne.s32.totalorder %s35, %s51
    %p53 = scmp.eq.s32.totalorder %s27, 0
    %p54 = por %p52, %p53
    %s56 = sadd.s32 %s55, 1
    %p59 = scmp.eq.s32.totalorder %s21, 1
    %p60 = scmp.ne.s32.totalorder %s55, %s57
    %p61 = scmp.eq.s32.totalorder %s21, 0
    %p62 = por %p60, %p61
    %p63 = scmp.ne.s32.totalorder %s55, %s57
    %p64 = scmp.eq.s32.totalorder %s26, 1
    %p65 = por %p63, %p64
    %p66 = scmp.ne.s32.totalorder %s57, %s58
    %p67 = scmp.eq.s32.totalorder %s26, 0
    %p68 = por %p66, %p67
    %p69 = scmp.ne.s32.totalorder %s57, %s58
    %p70 = scmp.eq.s32.totalorder %s27, 1
    %p71 = por %p69, %p70
    %p73 = scmp.ne.s32.totalorder %s58, %s72
    %p74 = scmp.eq.s32.totalorder %s27, 0
    %p75 = por %p73, %p74
    %s77 = sadd.s32 %s76, 1
    %p80 = scmp.eq.s32.totalorder %s21, 1
    %p81 = scmp.ne.s32.totalorder %s76, %s78
    %p82 = scmp.eq.s32.totalorder %s21, 0
    %p83 = por %p81, %p82
    %p84 = scmp.ne.s32.totalorder %s76, %s78
    %p85 = scmp.eq.s32.totalorder %s26, 1
    %p86 = por %p84, %p85
    %p87 = scmp.ne.s32.totalorder %s78, %s79
    %p88 = scmp.eq.s32.totalorder %s26, 0
    %p89 = por %p87, %p88
    %p90 = scmp.ne.s32.totalorder %s78, %s79
    %p91 = scmp.eq.s32.totalorder %s27, 1
    %p92 = por %p90, %p91
    %p94 = scmp.ne.s32.totalorder %s79, %s93
    %p95 = scmp.eq.s32.totalorder %s27, 0
    %p96 = por %p94, %p95
    %s98 = sadd.s32 %s97, 1
    %p101 = scmp.eq.s32.totalorder %s21, 1
    %p102 = scmp.ne.s32.totalorder %s97, %s99
    %p103 = scmp.eq.s32.totalorder %s21, 0
    %p104 = por %p102, %p103
    %p105 = scmp.ne.s32.totalorder %s97, %s99
    %p106 = scmp.eq.s32.totalorder %s26, 1
    %p107 = por %p105, %p106
    %p108 = scmp.ne.s32.totalorder %s99, %s100
    %p109 = scmp.eq.s32.totalorder %s26, 0
    %p110 = por %p108, %p109
    %p111 = scmp.ne.s32.totalorder %s99, %s100
    %p112 = scmp.eq.s32.totalorder %s27, 1
    %p113 = por %p111, %p112
    %p115 = scmp.ne.s32.totalorder %s100, %s114
    %p116 = scmp.eq.s32.totalorder %s27, 0
    %p117 = por %p115, %p116
    %s119 = sadd.s32 %s118, 1
    %p122 = scmp.eq.s32.totalorder %s21, 1
    %p123 = scmp.ne.s32.totalorder %s118, %s120
    %p124 = scmp.eq.s32.totalorder %s21, 0
    %p125 = por %p123, %p124
    %p126 = scmp.ne.s32.totalorder %s118, %s120
    %p127 = scmp.eq.s32.totalorder %s26, 1
    %p128 = por %p126, %p127
    %p129 = scmp.ne.s32.totalorder %s120, %s121
    %p130 = scmp.eq.s32.totalorder %s26, 0
    %p131 = por %p129, %p130
    %p132 = scmp.ne.s32.totalorder %s120, %s121
    %p133 = scmp.eq.s32.totalorder %s27, 1
    %p134 = por %p132, %p133
    %p136 = scmp.ne.s32.totalorder %s121, %s135
    %p137 = scmp.eq.s32.totalorder %s27, 0
    %p138 = por %p136, %p137
    %s140 = sadd.s32 %s139, 1
    %p143 = scmp.eq.s32.totalorder %s21, 1
    %p144 = scmp.ne.s32.totalorder %s139, %s141
    %p145 = scmp.eq.s32.totalorder %s21, 0
    %p146 = por %p144, %p145
    %p147 = scmp.ne.s32.totalorder %s139, %s141
    %p148 = scmp.eq.s32.totalorder %s26, 1
    %p149 = por %p147, %p148
    %p150 = scmp.ne.s32.totalorder %s141, %s142
    %p151 = scmp.eq.s32.totalorder %s26, 0
    %p152 = por %p150, %p151
    %p153 = scmp.ne.s32.totalorder %s141, %s142
    %p154 = scmp.eq.s32.totalorder %s27, 1
    %p155 = por %p153, %p154
    %p157 = scmp.ne.s32.totalorder %s142, %s156
    %p158 = scmp.eq.s32.totalorder %s27, 0
    %p159 = por %p157, %p158
    %s161 = sadd.s32 %s160, 1
    %p164 = scmp.eq.s32.totalorder %s21, 1
    %p165 = scmp.ne.s32.totalorder %s160, %s162
    %p166 = scmp.eq.s32.totalorder %s21, 0
    %p167 = por %p165, %p166
    %p168 = scmp.ne.s32.totalorder %s160, %s162
    %p169 = scmp.eq.s32.totalorder %s26, 1
    %p170 = por %p168, %p169
    %p171 = scmp.ne.s32.totalorder %s162, %s163
    %p172 = scmp.eq.s32.totalorder %s26, 0
    %p173 = por %p171, %p172
    %p174 = scmp.ne.s32.totalorder %s162, %s163
    %p175 = scmp.eq.s32.totalorder %s27, 1
    %p176 = por %p174, %p175
    %p178 = scmp.ne.s32.totalorder %s163, %s177
    %p179 = scmp.eq.s32.totalorder %s27, 0
    %p180 = por %p178, %p179
    %s182 = sadd.s32 %s181, 1
    %p185 = scmp.eq.s32.totalorder %s21, 1
    %p186 = scmp.ne.s32.totalorder %s181, %s183
    %p187 = scmp.eq.s32.totalorder %s21, 0
    %p188 = por %p186, %p187
    %p189 = scmp.ne.s32.totalorder %s181, %s183
    %p190 = scmp.eq.s32.totalorder %s26, 1
    %p191 = por %p189, %p190
    %p192 = scmp.ne.s32.totalorder %s183, %s184
    %p193 = scmp.eq.s32.totalorder %s26, 0
    %p194 = por %p192, %p193
    %p195 = scmp.ne.s32.totalorder %s183, %s184
    %p196 = scmp.eq.s32.totalorder %s27, 1
    %p197 = por %p195, %p196
    %p199 = scmp.ne.s32.totalorder %s184, %s198
    %p200 = scmp.eq.s32.totalorder %s27, 0
    %p201 = por %p199, %p200
    %s203 = sadd.s32 %s202, 1
    %p206 = scmp.eq.s32.totalorder %s21, 1
    %p207 = scmp.ne.s32.totalorder %s202, %s204
    %p208 = scmp.eq.s32.totalorder %s21, 0
    %p209 = por %p207, %p208
    %p210 = scmp.ne.s32.totalorder %s202, %s204
    %p211 = scmp.eq.s32.totalorder %s26, 1
    %p212 = por %p210, %p211
    %p213 = scmp.ne.s32.totalorder %s204, %s205
    %p214 = scmp.eq.s32.totalorder %s26, 0
    %p215 = por %p213, %p214
    %p216 = scmp.ne.s32.totalorder %s204, %s205
    %p217 = scmp.eq.s32.totalorder %s27, 1
    %p218 = por %p216, %p217
    %p220 = scmp.ne.s32.totalorder %s205, %s219
    %p221 = scmp.eq.s32.totalorder %s27, 0
    %p222 = por %p220, %p221
    %s224 = sadd.s32 %s223, 1
    %p227 = scmp.eq.s32.totalorder %s21, 1
    %p228 = scmp.ne.s32.totalorder %s223, %s225
    %p229 = scmp.eq.s32.totalorder %s21, 0
    %p230 = por %p228, %p229
    %p231 = scmp.ne.s32.totalorder %s223, %s225
    %p232 = scmp.eq.s32.totalorder %s26, 1
    %p233 = por %p231, %p232
    %p234 = scmp.ne.s32.totalorder %s225, %s226
    %p235 = scmp.eq.s32.totalorder %s26, 0
    %p236 = por %p234, %p235
    %p237 = scmp.ne.s32.totalorder %s225, %s226
    %p238 = scmp.eq.s32.totalorder %s27, 1
    %p239 = por %p237, %p238
    %p241 = scmp.ne.s32.totalorder %s226, %s240
    %p242 = scmp.eq.s32.totalorder %s27, 0
    %p243 = por %p241, %p242
    %s245 = sadd.s32 %s244, 1
    %p248 = scmp.eq.s32.totalorder %s21, 1
    %p249 = scmp.ne.s32.totalorder %s244, %s246
    %p250 = scmp.eq.s32.totalorder %s21, 0
    %p251 = por %p249, %p250
    %p252 = scmp.ne.s32.totalorder %s244, %s246
    %p253 = scmp.eq.s32.totalorder %s26, 1
    %p254 = por %p252, %p253
    %p255 = scmp.ne.s32.totalorder %s246, %s247
    %p256 = scmp.eq.s32.totalorder %s26, 0
    %p257 = por %p255, %p256
    %p258 = scmp.ne.s32.totalorder %s246, %s247
    %p259 = scmp.eq.s32.totalorder %s27, 1
    %p260 = por %p258, %p259
    %p262 = scmp.ne.s32.totalorder %s247, %s261
    %p263 = scmp.eq.s32.totalorder %s27, 0
    %p264 = por %p262, %p263
    %s266 = sadd.s32 %s265, 1
    %p269 = scmp.eq.s32.totalorder %s21, 1
    %p270 = scmp.ne.s32.totalorder %s265, %s267
    %p271 = scmp.eq.s32.totalorder %s21, 0
    %p272 = por %p270, %p271
    %p273 = scmp.ne.s32.totalorder %s265, %s267
    %p274 = scmp.eq.s32.totalorder %s26, 1
    %p275 = por %p273, %p274
    %p276 = scmp.ne.s32.totalorder %s267, %s268
    %p277 = scmp.eq.s32.totalorder %s26, 0
    %p278 = por %p276, %p277
    %p279 = scmp.ne.s32.totalorder %s267, %s268
    %p280 = scmp.eq.s32.totalorder %s27, 1
    %p281 = por %p279, %p280
    %p283 = scmp.ne.s32.totalorder %s268, %s282
    %p284 = scmp.eq.s32.totalorder %s27, 0
    %p285 = por %p283, %p284
    %s287 = sadd.s32 %s286, 1
    %p290 = scmp.eq.s32.totalorder %s21, 1
    %p291 = scmp.ne.s32.totalorder %s286, %s288
    %p292 = scmp.eq.s32.totalorder %s21, 0
    %p293 = por %p291, %p292
    %p294 = scmp.ne.s32.totalorder %s286, %s288
    %p295 = scmp.eq.s32.totalorder %s26, 1
    %p296 = por %p294, %p295
    %p297 = scmp.ne.s32.totalorder %s288, %s289
    %p298 = scmp.eq.s32.totalorder %s26, 0
    %p299 = por %p297, %p298
    %p300 = scmp.ne.s32.totalorder %s288, %s289
    %p301 = scmp.eq.s32.totalorder %s27, 1
    %p302 = por %p300, %p301
    %p304 = scmp.ne.s32.totalorder %s289, %s303
    %p305 = scmp.eq.s32.totalorder %s27, 0
    %p306 = por %p304, %p305
    %s308 = sadd.s32 %s307, 1
    %p311 = scmp.eq.s32.totalorder %s21, 1
    %p312 = scmp.ne.s32.totalorder %s307, %s309
    %p313 = scmp.eq.s32.totalorder %s21, 0
    %p314 = por %p312, %p313
    %p315 = scmp.ne.s32.totalorder %s307, %s309
    %p316 = scmp.eq.s32.totalorder %s26, 1
    %p317 = por %p315, %p316
    %p318 = scmp.ne.s32.totalorder %s309, %s310
    %p319 = scmp.eq.s32.totalorder %s26, 0
    %p320 = por %p318, %p319
    %p321 = scmp.ne.s32.totalorder %s309, %s310
    %p322 = scmp.eq.s32.totalorder %s27, 1
    %p323 = por %p321, %p322
    %p325 = scmp.ne.s32.totalorder %s310, %s324
    %p326 = scmp.eq.s32.totalorder %s27, 0
    %p327 = por %p325, %p326
    %s329 = sadd.s32 %s328, 1
    %p332 = scmp.eq.s32.totalorder %s21, 1
    %p333 = scmp.ne.s32.totalorder %s328, %s330
    %p334 = scmp.eq.s32.totalorder %s21, 0
    %p335 = por %p333, %p334
    %p336 = scmp.ne.s32.totalorder %s328, %s330
    %p337 = scmp.eq.s32.totalorder %s26, 1
    %p338 = por %p336, %p337
    %p339 = scmp.ne.s32.totalorder %s330, %s331
    %p340 = scmp.eq.s32.totalorder %s26, 0
    %p341 = por %p339, %p340
    %p342 = scmp.ne.s32.totalorder %s330, %s331
    %p343 = scmp.eq.s32.totalorder %s27, 1
    %p344 = por %p342, %p343
    %p346 = scmp.ne.s32.totalorder %s331, %s345
    %p347 = scmp.eq.s32.totalorder %s27, 0
    %p348 = por %p346, %p347
    %s349 = ssub.s32 %s21, %s28
    %p350 = scmp.eq.s32.totalorder %s349, 0
    %s352 = sadd.s32 %s351, 1
    %s353 = scalar_select %p350, %s351, %s352
    %p356 = pneg %p350
    %p357 = scmp.eq.s32.totalorder %s21, 1
    %p358 = por %p356, %p357
    %p359 = scmp.ne.s32.totalorder %s351, %s354
    %p360 = scmp.eq.s32.totalorder %s21, 0
    %p361 = por %p359, %p360
    %p362 = scmp.ne.s32.totalorder %s351, %s354
    %p363 = scmp.eq.s32.totalorder %s26, 1
    %p364 = por %p362, %p363
    %p365 = scmp.ne.s32.totalorder %s354, %s355
    %p366 = scmp.eq.s32.totalorder %s26, 0
    %p367 = por %p365, %p366
    %p368 = scmp.ne.s32.totalorder %s354, %s355
    %p369 = scmp.eq.s32.totalorder %s27, 1
    %p370 = por %p368, %p369
    %p372 = scmp.ne.s32.totalorder %s355, %s371
    %p373 = scmp.eq.s32.totalorder %s27, 0
    %p374 = por %p372, %p373
    %p375 = scmp.le.s32.totalorder 1, %s21
    %p376 = scmp.lt.s32.totalorder %s21, 3
    %p377 = pnand %p375, %p376
    %p378 = pneg %p377
    // Predicated region
    $region9: #{detector_forward.1} parent=5 // pred_check
      _
    $region10: #{detector_forward.1} parent=5 // pred_check_branch
      %380 = sbr.rel (%p377) target = $region12
    $region11: #{detector_forward.1} parent=5 // pred_region
      %s381 = ssub.s32 %s21, 1
      // Predicated region
      $region13: #{detector_forward.1} parent=11 // pred_check
        %p382 = pneg %p68
      $region14: #{detector_forward.1} parent=11 // pred_check_branch
        %384 = sbr.rel (%p382) target = $region16
      $region15: #{detector_forward.1} parent=11 // pred_region
        _
      $region16: #{detector_forward.1} parent=11 // pred_fallthru
        _
      // Predicated region
      $region17: #{detector_forward.1} parent=11 // pred_check
        %p385 = pneg %p89
      $region18: #{detector_forward.1} parent=11 // pred_check_branch
        %387 = sbr.rel (%p385) target = $region20
      $region19: #{detector_forward.1} parent=11 // pred_region
        _
      $region20: #{detector_forward.1} parent=11 // pred_fallthru
        _
      // Predicated region
      $region21: #{detector_forward.1} parent=11 // pred_check
        %p388 = pneg %p110
      $region22: #{detector_forward.1} parent=11 // pred_check_branch
        %390 = sbr.rel (%p388) target = $region24
      $region23: #{detector_forward.1} parent=11 // pred_region
        _
      $region24: #{detector_forward.1} parent=11 // pred_fallthru
        _
      // Predicated region
      $region25: #{detector_forward.1} parent=11 // pred_check
        %p391 = pneg %p131
      $region26: #{detector_forward.1} parent=11 // pred_check_branch
        %393 = sbr.rel (%p391) target = $region28
      $region27: #{detector_forward.1} parent=11 // pred_region
        _
      $region28: #{detector_forward.1} parent=11 // pred_fallthru
        _
      // Predicated region
      $region29: #{detector_forward.1} parent=11 // pred_check
        %p394 = pneg %p152
      $region30: #{detector_forward.1} parent=11 // pred_check_branch
        %396 = sbr.rel (%p394) target = $region32
      $region31: #{detector_forward.1} parent=11 // pred_region
        _
      $region32: #{detector_forward.1} parent=11 // pred_fallthru
        _
      // Predicated region
      $region33: #{detector_forward.1} parent=11 // pred_check
        %p397 = pneg %p173
      $region34: #{detector_forward.1} parent=11 // pred_check_branch
        %399 = sbr.rel (%p397) target = $region36
      $region35: #{detector_forward.1} parent=11 // pred_region
        _
      $region36: #{detector_forward.1} parent=11 // pred_fallthru
        _
      // Predicated region
      $region37: #{detector_forward.1} parent=11 // pred_check
        %p400 = pneg %p194
      $region38: #{detector_forward.1} parent=11 // pred_check_branch
        %402 = sbr.rel (%p400) target = $region40
      $region39: #{detector_forward.1} parent=11 // pred_region
        _
      $region40: #{detector_forward.1} parent=11 // pred_fallthru
        _
      // Predicated region
      $region41: #{detector_forward.1} parent=11 // pred_check
        %p403 = pneg %p215
      $region42: #{detector_forward.1} parent=11 // pred_check_branch
        %405 = sbr.rel (%p403) target = $region44
      $region43: #{detector_forward.1} parent=11 // pred_region
        _
      $region44: #{detector_forward.1} parent=11 // pred_fallthru
        _
      // Predicated region
      $region45: #{detector_forward.1} parent=11 // pred_check
        %p406 = pneg %p236
      $region46: #{detector_forward.1} parent=11 // pred_check_branch
        %408 = sbr.rel (%p406) target = $region48
      $region47: #{detector_forward.1} parent=11 // pred_region
        _
      $region48: #{detector_forward.1} parent=11 // pred_fallthru
        _
      // Predicated region
      $region49: #{detector_forward.1} parent=11 // pred_check
        %p409 = pneg %p257
      $region50: #{detector_forward.1} parent=11 // pred_check_branch
        %411 = sbr.rel (%p409) target = $region52
      $region51: #{detector_forward.1} parent=11 // pred_region
        _
      $region52: #{detector_forward.1} parent=11 // pred_fallthru
        _
      // Predicated region
      $region53: #{detector_forward.1} parent=11 // pred_check
        %p412 = pneg %p278
      $region54: #{detector_forward.1} parent=11 // pred_check_branch
        %414 = sbr.rel (%p412) target = $region56
      $region55: #{detector_forward.1} parent=11 // pred_region
        _
      $region56: #{detector_forward.1} parent=11 // pred_fallthru
        _
      // Predicated region
      $region57: #{detector_forward.1} parent=11 // pred_check
        %p415 = pneg %p299
      $region58: #{detector_forward.1} parent=11 // pred_check_branch
        %417 = sbr.rel (%p415) target = $region60
      $region59: #{detector_forward.1} parent=11 // pred_region
        _
      $region60: #{detector_forward.1} parent=11 // pred_fallthru
        _
      // Predicated region
      $region61: #{detector_forward.1} parent=11 // pred_check
        %p418 = pneg %p320
      $region62: #{detector_forward.1} parent=11 // pred_check_branch
        %420 = sbr.rel (%p418) target = $region64
      $region63: #{detector_forward.1} parent=11 // pred_region
        _
      $region64: #{detector_forward.1} parent=11 // pred_fallthru
        _
      // Predicated region
      $region65: #{detector_forward.1} parent=11 // pred_check
        %p421 = pneg %p341
      $region66: #{detector_forward.1} parent=11 // pred_check_branch
        %423 = sbr.rel (%p421) target = $region68
      $region67: #{detector_forward.1} parent=11 // pred_region
        _
      $region68: #{detector_forward.1} parent=11 // pred_fallthru
        _
    $region12: #{detector_forward.1} parent=5 // pred_fallthru
      _
    %p424 = scmp.lt.s32.totalorder %s21, 2
    // Predicated region
    $region69: #{detector_forward.1} parent=5 // pred_check
      %p425 = pneg %p424
    $region70: #{detector_forward.1} parent=5 // pred_check_branch
      %427 = sbr.rel (%p425) target = $region72
    $region71: #{detector_forward.1} parent=5 // pred_region
      // Predicated region
      $region73: #{detector_forward.1} parent=71 // pred_check
        %p428 = pneg %p41
      $region74: #{detector_forward.1} parent=71 // pred_check_branch
        %430 = sbr.rel (%p428) target = $region76
      $region75: #{detector_forward.1} parent=71 // pred_region
        %p431 = scmp.lt.s32.totalorder %s21, 1
        %s432 = scalar_select %p431, %s21, 1
        %s433 = smul.addr %s432, 13
        %s434 = smul.addr %s433, 4
        %s435 = scalar_lea.vmem %s0, %s434
      $region76: #{detector_forward.1} parent=71 // pred_fallthru
        _
    $region72: #{detector_forward.1} parent=5 // pred_fallthru
      _
    %p436 = scmp.le.s32.totalorder 1, %s21
    %p437 = scmp.lt.s32.totalorder %s21, 3
    %p438 = pnand %p436, %p437
    %p439 = pneg %p438
    // Predicated region
    $region77: #{detector_forward.1} parent=5 // pred_check
      _
    $region78: #{detector_forward.1} parent=5 // pred_check_branch
      %441 = sbr.rel (%p438) target = $region80
    $region79: #{detector_forward.1} parent=5 // pred_region
      %s442 = ssub.s32 %s21, 1
      %p443 = scmp.lt.s32.totalorder %s26, 1
      %s444 = scalar_select %p443, %s26, 1
      %s445 = smul.addr %s444, 13
      %s446 = smul.addr %s445, 4
      %s447 = scalar_lea.vmem %s0, %s446
      %p448 = pneg %p47
      %p449 = pneg %p44
      %p450 = pneg %p68
      %p451 = pneg %p65
      %p452 = pneg %p89
      %p453 = pneg %p86
      %p454 = pneg %p110
      %p455 = pneg %p107
      %p456 = pneg %p131
      %p457 = pneg %p128
      %p458 = pneg %p152
      %p459 = pneg %p149
      %p460 = pneg %p173
      %p461 = pneg %p170
      %p462 = pneg %p194
      %p463 = pneg %p191
      %p464 = pneg %p215
      %p465 = pneg %p212
      %p466 = pneg %p236
      %p467 = pneg %p233
      %p468 = pneg %p257
      %p469 = pneg %p254
      %p470 = pneg %p278
      %p471 = pneg %p275
      %p472 = pneg %p299
      %p473 = pneg %p296
      %p474 = pneg %p320
      %p475 = pneg %p317
      %p476 = pneg %p341
      %p477 = pneg %p338
      %p478 = pneg %p367
      %p479 = pneg %p364
      %p480 = scmp.lt.s32.totalorder %s26, 1
      %s481 = scalar_select %p480, %s26, 1
      %s482 = scalar_lea.vmem %s15, %s481
      %p483 = scmp.lt.s32.totalorder %s26, 1
      %s484 = scalar_select %p483, %s26, 1
      %s485 = smul.addr %s484, 13
      %s486 = smul.addr %s485, 4
      %s487 = scalar_lea.vmem %s0, %s486
      %p488 = scmp.lt.s32.totalorder %s26, 1
      %s489 = scalar_select %p488, %s26, 1
      %s490 = scalar_lea.vmem %s15, %s489
      %492 = vst [vmem:[#allocation2] sm:$0xff] 0.0
      %493 = vst [vmem:[#allocation2 + $0x8] sm:$0xff] 0.0
      %494 = vst [vmem:[#allocation2 + $0x74] sm:$0xff] 0.0
      %495 = vst [vmem:[#allocation2 + $0x7c] sm:$0xff] 0.0
      %v496 = vld [vmem:[%s487] sm:$0xf]
      %v497 = vld [vmem:[%s487 + $0x4] sm:$0xf]
      %v498 = vld [vmem:[%s487 + $0x8] sm:$0xf]
      %v499 = vld [vmem:[%s487 + $0xc] sm:$0xf]
      %v500 = vld [vmem:[%s487 + $0x10] sm:$0xf]
      %v501 = vld [vmem:[%s487 + $0x14] sm:$0xf]
      %v502 = vld [vmem:[%s487 + $0x18] sm:$0xf]
      %v503 = vld [vmem:[%s487 + $0x1c] sm:$0xf]
      %v504 = vld [vmem:[%s487 + $0x20] sm:$0xf]
      %v505 = vld [vmem:[%s487 + $0x24] sm:$0xf]
      %v506 = vld [vmem:[%s487 + $0x28] sm:$0xf]
      %v507 = vld [vmem:[%s487 + $0x2c] sm:$0xf]
      %v508 = vld [vmem:[%s487 + $0x30] sm:$0x3]
      %v509 = vld [vmem:[%s3] sm:$0xf]
      %v510 = vld [vmem:[%s3 + $0x4] sm:$0xf]
      %v511 = vld [vmem:[%s3 + $0x8] sm:$0xf]
      %v512 = vld [vmem:[%s3 + $0xc] sm:$0xf]
      %v513 = vld [vmem:[%s3 + $0x10] sm:$0xf]
      %v514 = vld [vmem:[%s3 + $0x14] sm:$0xf]
      %v515 = vld [vmem:[%s3 + $0x18] sm:$0xf]
      %v516 = vld [vmem:[%s3 + $0x1c] sm:$0xf]
      %v517 = vld [vmem:[%s3 + $0x20] sm:$0xf]
      %v518 = vld [vmem:[%s3 + $0x24] sm:$0xf]
      %v519 = vld [vmem:[%s3 + $0x28] sm:$0xf]
      %v520 = vld [vmem:[%s3 + $0x2c] sm:$0xf]
      %v521 = vld [vmem:[%s3 + $0x30] sm:$0xf]
      %v522 = vld [vmem:[%s3 + $0x34] sm:$0xf]
      %v523 = vld [vmem:[%s3 + $0x38] sm:$0xf]
      %v524 = vld [vmem:[%s3 + $0x3c] sm:$0xf]
      %v525 = vld [vmem:[%s4] sm:$0x1]
      %v527 = vperm.slane %v525, 0
      %v542 = vunpack.c.l.b16 %v496
      %v543 = vunpack.c.l.b16 %v497
      %v544 = vunpack.c.l.b16 %v498
      %v545 = vunpack.c.l.b16 %v499
      %v546 = vunpack.c.l.b16 %v500
      %v547 = vunpack.c.l.b16 %v501
      %v548 = vunpack.c.l.b16 %v502
      %v549 = vunpack.c.l.b16 %v503
      %v550 = vunpack.c.l.b16 %v504
      %v551 = vunpack.c.l.b16 %v505
      %v552 = vunpack.c.l.b16 %v506
      %v553 = vunpack.c.l.b16 %v507
      %v554 = vunpack.c.l.b16 %v508
      %v555 = vpack.c.b16 %v543, %v542
      %v556 = vpack.c.b16 %v545, %v544
      %v557 = vpack.c.b16 %v547, %v546
      %v558 = vpack.c.b16 %v549, %v548
      %v559 = vpack.c.b16 %v551, %v550
      %v560 = vpack.c.b16 %v553, %v552
      %v561 = vpack.c.b16 %v554, %v554
      %v585 = vunpack.c.l.b16 %v509
      %v586 = vunpack.c.l.b16 %v510
      %v587 = vunpack.c.l.b16 %v511
      %v588 = vunpack.c.l.b16 %v512
      %v589 = vunpack.c.l.b16 %v513
      %v590 = vunpack.c.l.b16 %v514
      %v591 = vunpack.c.l.b16 %v515
      %v592 = vunpack.c.l.b16 %v516
      %v593 = vunpack.c.l.b16 %v517
      %v594 = vunpack.c.l.b16 %v518
      %v595 = vunpack.c.l.b16 %v519
      %v596 = vunpack.c.l.b16 %v520
      %v597 = vunpack.c.l.b16 %v521
      %v598 = vunpack.c.l.b16 %v522
      %v599 = vunpack.c.l.b16 %v523
      %v600 = vunpack.c.l.b16 %v524
      %v601 = vpack.c.b16 %v586, %v585
      %v602 = vpack.c.b16 %v588, %v587
      %v603 = vpack.c.b16 %v590, %v589
      %v604 = vpack.c.b16 %v592, %v591
      %v605 = vpack.c.b16 %v594, %v593
      %v606 = vpack.c.b16 %v596, %v595
      %v607 = vpack.c.b16 %v598, %v597
      %v608 = vpack.c.b16 %v600, %v599
      %617 = vmatpush.bf16.msra.mxu0 %v608
      %618 = vmatpush.bf16.msra.mxu0 %v607
      %619 = vmatpush.bf16.msra.mxu0 %v606
      %620 = vmatpush.bf16.msra.mxu0 %v605
      %621 = vmatpush.bf16.msra.mxu0 %v604
      %622 = vmatpush.bf16.msra.mxu0 %v603
      %623 = vmatpush.bf16.msra.mxu0 %v602
      %624 = vmatpush.bf16.msra.mxu0 %v601
      %625 = vmatmul.bf16.gmra.mxu0 %v555
      %v626 = vpop.f32.mrf.mxu0
      %v627 = vadd.f32 %v527, %v626
      %v628 = vpop.f32.mrf.mxu0
      %v629 = vadd.f32 %v527, %v628
      %630 = vmatmul.bf16.gmra.mxu0 %v556
      %v631 = vpop.f32.mrf.mxu0
      %v632 = vadd.f32 %v527, %v631
      %v633 = vpop.f32.mrf.mxu0
      %v634 = vadd.f32 %v527, %v633
      %635 = vmatmul.bf16.gmra.mxu0 %v557
      %v636 = vpop.f32.mrf.mxu0
      %v637 = vadd.f32 %v527, %v636
      %v638 = vpop.f32.mrf.mxu0
      %v639 = vadd.f32 %v527, %v638
      %640 = vmatmul.bf16.gmra.mxu0 %v558
      %v641 = vpop.f32.mrf.mxu0
      %v642 = vadd.f32 %v527, %v641
      %v643 = vpop.f32.mrf.mxu0
      %v644 = vadd.f32 %v527, %v643
      %645 = vmatmul.bf16.gmra.mxu0 %v559
      %v646 = vpop.f32.mrf.mxu0
      %v647 = vadd.f32 %v527, %v646
      %v648 = vpop.f32.mrf.mxu0
      %v649 = vadd.f32 %v527, %v648
      %650 = vmatmul.bf16.gmra.mxu0 %v560
      %v651 = vpop.f32.mrf.mxu0
      %v652 = vadd.f32 %v527, %v651
      %v653 = vpop.f32.mrf.mxu0
      %v654 = vadd.f32 %v527, %v653
      %655 = vmatmul.bf16.gmra.mxu0 %v561
      %v656 = vpop.f32.mrf.mxu0
      %v657 = vadd.f32 %v527, %v656
      %v658 = vpop.f32.mrf.mxu0
      %659 = vdwg.mxu0
      %v660 = vxor.u32 %v627, 2147483648
      %v661 = vxor.u32 %v629, 2147483648
      %v662 = vxor.u32 %v632, 2147483648
      %v663 = vxor.u32 %v634, 2147483648
      %v664 = vxor.u32 %v637, 2147483648
      %v665 = vxor.u32 %v639, 2147483648
      %v666 = vxor.u32 %v642, 2147483648
      %v667 = vxor.u32 %v644, 2147483648
      %v668 = vxor.u32 %v647, 2147483648
      %v669 = vxor.u32 %v649, 2147483648
      %v670 = vxor.u32 %v652, 2147483648
      %v671 = vxor.u32 %v654, 2147483648
      %v672 = vxor.u32 %v657, 2147483648
      %v673 = vmul.f32 %v660, 1.442695
      %v674 = vpow.pop %v673
      %v675 = vmul.f32 %v661, 1.442695
      %v676 = vpow.pop %v675
      %v677 = vmul.f32 %v662, 1.442695
      %v678 = vpow.pop %v677
      %v679 = vmul.f32 %v663, 1.442695
      %v680 = vpow.pop %v679
      %v681 = vmul.f32 %v664, 1.442695
      %v682 = vpow.pop %v681
      %v683 = vmul.f32 %v665, 1.442695
      %v684 = vpow.pop %v683
      %v685 = vmul.f32 %v666, 1.442695
      %v686 = vpow.pop %v685
      %v687 = vmul.f32 %v667, 1.442695
      %v688 = vpow.pop %v687
      %v689 = vmul.f32 %v668, 1.442695
      %v690 = vpow.pop %v689
      %v691 = vmul.f32 %v669, 1.442695
      %v692 = vpow.pop %v691
      %v693 = vmul.f32 %v670, 1.442695
      %v694 = vpow.pop %v693
      %v695 = vmul.f32 %v671, 1.442695
      %v696 = vpow.pop %v695
      %v697 = vmul.f32 %v672, 1.442695
      %v698 = vpow.pop %v697
      %v699 = vadd.f32 %v674, 1.0
      %v700 = vadd.f32 %v676, 1.0
      %v701 = vadd.f32 %v678, 1.0
      %v702 = vadd.f32 %v680, 1.0
      %v703 = vadd.f32 %v682, 1.0
      %v704 = vadd.f32 %v684, 1.0
      %v705 = vadd.f32 %v686, 1.0
      %v706 = vadd.f32 %v688, 1.0
      %v707 = vadd.f32 %v690, 1.0
      %v708 = vadd.f32 %v692, 1.0
      %v709 = vadd.f32 %v694, 1.0
      %v710 = vadd.f32 %v696, 1.0
      %v711 = vadd.f32 %v698, 1.0
      %v712 = vrcp.pop %v699
      %v713 = vmul.f32 %v699, %v712
      %v714 = vsub.f32 1.0, %v713
      %v715 = vmul.f32 %v712, %v714
      %v716 = vadd.f32 %v712, %v715
      %vm717 = vweird.f32 %v699
      %vm718 = vweird.f32 %v712
      %vm719 = vmor %vm717, %vm718
      %v720 = vsel %vm719, %v712, %v716
      %v721 = vand.u32 2147483647, %v699
      %vm722 = vcmp.eq.f32.partialorder %v721, 8.507059e+37
      %v723 = vand.u32 %v699, 2147483648
      %v724 = vor.u32 1.1754944e-38, %v723
      %v725 = vsel %vm722, %v724, %v720
      %v726 = vmul.f32 1.0, %v725
      %v727 = vrcp.pop %v700
      %v728 = vmul.f32 %v700, %v727
      %v729 = vsub.f32 1.0, %v728
      %v730 = vmul.f32 %v727, %v729
      %v731 = vadd.f32 %v727, %v730
      %vm732 = vweird.f32 %v700
      %vm733 = vweird.f32 %v727
      %vm734 = vmor %vm732, %vm733
      %v735 = vsel %vm734, %v727, %v731
      %v736 = vand.u32 2147483647, %v700
      %vm737 = vcmp.eq.f32.partialorder %v736, 8.507059e+37
      %v738 = vand.u32 %v700, 2147483648
      %v739 = vor.u32 1.1754944e-38, %v738
      %v740 = vsel %vm737, %v739, %v735
      %v741 = vmul.f32 1.0, %v740
      %v742 = vrcp.pop %v701
      %v743 = vmul.f32 %v701, %v742
      %v744 = vsub.f32 1.0, %v743
      %v745 = vmul.f32 %v742, %v744
      %v746 = vadd.f32 %v742, %v745
      %vm747 = vweird.f32 %v701
      %vm748 = vweird.f32 %v742
      %vm749 = vmor %vm747, %vm748
      %v750 = vsel %vm749, %v742, %v746
      %v751 = vand.u32 2147483647, %v701
      %vm752 = vcmp.eq.f32.partialorder %v751, 8.507059e+37
      %v753 = vand.u32 %v701, 2147483648
      %v754 = vor.u32 1.1754944e-38, %v753
      %v755 = vsel %vm752, %v754, %v750
      %v756 = vmul.f32 1.0, %v755
      %v757 = vrcp.pop %v702
      %v758 = vmul.f32 %v702, %v757
      %v759 = vsub.f32 1.0, %v758
      %v760 = vmul.f32 %v757, %v759
      %v761 = vadd.f32 %v757, %v760
      %vm762 = vweird.f32 %v702
      %vm763 = vweird.f32 %v757
      %vm764 = vmor %vm762, %vm763
      %v765 = vsel %vm764, %v757, %v761
      %v766 = vand.u32 2147483647, %v702
      %vm767 = vcmp.eq.f32.partialorder %v766, 8.507059e+37
      %v768 = vand.u32 %v702, 2147483648
      %v769 = vor.u32 1.1754944e-38, %v768
      %v770 = vsel %vm767, %v769, %v765
      %v771 = vmul.f32 1.0, %v770
      %v772 = vrcp.pop %v703
      %v773 = vmul.f32 %v703, %v772
      %v774 = vsub.f32 1.0, %v773
      %v775 = vmul.f32 %v772, %v774
      %v776 = vadd.f32 %v772, %v775
      %vm777 = vweird.f32 %v703
      %vm778 = vweird.f32 %v772
      %vm779 = vmor %vm777, %vm778
      %v780 = vsel %vm779, %v772, %v776
      %v781 = vand.u32 2147483647, %v703
      %vm782 = vcmp.eq.f32.partialorder %v781, 8.507059e+37
      %v783 = vand.u32 %v703, 2147483648
      %v784 = vor.u32 1.1754944e-38, %v783
      %v785 = vsel %vm782, %v784, %v780
      %v786 = vmul.f32 1.0, %v785
      %v787 = vrcp.pop %v704
      %v788 = vmul.f32 %v704, %v787
      %v789 = vsub.f32 1.0, %v788
      %v790 = vmul.f32 %v787, %v789
      %v791 = vadd.f32 %v787, %v790
      %vm792 = vweird.f32 %v704
      %vm793 = vweird.f32 %v787
      %vm794 = vmor %vm792, %vm793
      %v795 = vsel %vm794, %v787, %v791
      %v796 = vand.u32 2147483647, %v704
      %vm797 = vcmp.eq.f32.partialorder %v796, 8.507059e+37
      %v798 = vand.u32 %v704, 2147483648
      %v799 = vor.u32 1.1754944e-38, %v798
      %v800 = vsel %vm797, %v799, %v795
      %v801 = vmul.f32 1.0, %v800
      %v802 = vrcp.pop %v705
      %v803 = vmul.f32 %v705, %v802
      %v804 = vsub.f32 1.0, %v803
      %v805 = vmul.f32 %v802, %v804
      %v806 = vadd.f32 %v802, %v805
      %vm807 = vweird.f32 %v705
      %vm808 = vweird.f32 %v802
      %vm809 = vmor %vm807, %vm808
      %v810 = vsel %vm809, %v802, %v806
      %v811 = vand.u32 2147483647, %v705
      %vm812 = vcmp.eq.f32.partialorder %v811, 8.507059e+37
      %v813 = vand.u32 %v705, 2147483648
      %v814 = vor.u32 1.1754944e-38, %v813
      %v815 = vsel %vm812, %v814, %v810
      %v816 = vmul.f32 1.0, %v815
      %v817 = vrcp.pop %v706
      %v818 = vmul.f32 %v706, %v817
      %v819 = vsub.f32 1.0, %v818
      %v820 = vmul.f32 %v817, %v819
      %v821 = vadd.f32 %v817, %v820
      %vm822 = vweird.f32 %v706
      %vm823 = vweird.f32 %v817
      %vm824 = vmor %vm822, %vm823
      %v825 = vsel %vm824, %v817, %v821
      %v826 = vand.u32 2147483647, %v706
      %vm827 = vcmp.eq.f32.partialorder %v826, 8.507059e+37
      %v828 = vand.u32 %v706, 2147483648
      %v829 = vor.u32 1.1754944e-38, %v828
      %v830 = vsel %vm827, %v829, %v825
      %v831 = vmul.f32 1.0, %v830
      %v832 = vrcp.pop %v707
      %v833 = vmul.f32 %v707, %v832
      %v834 = vsub.f32 1.0, %v833
      %v835 = vmul.f32 %v832, %v834
      %v836 = vadd.f32 %v832, %v835
      %vm837 = vweird.f32 %v707
      %vm838 = vweird.f32 %v832
      %vm839 = vmor %vm837, %vm838
      %v840 = vsel %vm839, %v832, %v836
      %v841 = vand.u32 2147483647, %v707
      %vm842 = vcmp.eq.f32.partialorder %v841, 8.507059e+37
      %v843 = vand.u32 %v707, 2147483648
      %v844 = vor.u32 1.1754944e-38, %v843
      %v845 = vsel %vm842, %v844, %v840
      %v846 = vmul.f32 1.0, %v845
      %v847 = vrcp.pop %v708
      %v848 = vmul.f32 %v708, %v847
      %v849 = vsub.f32 1.0, %v848
      %v850 = vmul.f32 %v847, %v849
      %v851 = vadd.f32 %v847, %v850
      %vm852 = vweird.f32 %v708
      %vm853 = vweird.f32 %v847
      %vm854 = vmor %vm852, %vm853
      %v855 = vsel %vm854, %v847, %v851
      %v856 = vand.u32 2147483647, %v708
      %vm857 = vcmp.eq.f32.partialorder %v856, 8.507059e+37
      %v858 = vand.u32 %v708, 2147483648
      %v859 = vor.u32 1.1754944e-38, %v858
      %v860 = vsel %vm857, %v859, %v855
      %v861 = vmul.f32 1.0, %v860
      %v862 = vrcp.pop %v709
      %v863 = vmul.f32 %v709, %v862
      %v864 = vsub.f32 1.0, %v863
      %v865 = vmul.f32 %v862, %v864
      %v866 = vadd.f32 %v862, %v865
      %vm867 = vweird.f32 %v709
      %vm868 = vweird.f32 %v862
      %vm869 = vmor %vm867, %vm868
      %v870 = vsel %vm869, %v862, %v866
      %v871 = vand.u32 2147483647, %v709
      %vm872 = vcmp.eq.f32.partialorder %v871, 8.507059e+37
      %v873 = vand.u32 %v709, 2147483648
      %v874 = vor.u32 1.1754944e-38, %v873
      %v875 = vsel %vm872, %v874, %v870
      %v876 = vmul.f32 1.0, %v875
      %v877 = vrcp.pop %v710
      %v878 = vmul.f32 %v710, %v877
      %v879 = vsub.f32 1.0, %v878
      %v880 = vmul.f32 %v877, %v879
      %v881 = vadd.f32 %v877, %v880
      %vm882 = vweird.f32 %v710
      %vm883 = vweird.f32 %v877
      %vm884 = vmor %vm882, %vm883
      %v885 = vsel %vm884, %v877, %v881
      %v886 = vand.u32 2147483647, %v710
      %vm887 = vcmp.eq.f32.partialorder %v886, 8.507059e+37
      %v888 = vand.u32 %v710, 2147483648
      %v889 = vor.u32 1.1754944e-38, %v888
      %v890 = vsel %vm887, %v889, %v885
      %v891 = vmul.f32 1.0, %v890
      %v892 = vrcp.pop %v711
      %v893 = vmul.f32 %v711, %v892
      %v894 = vsub.f32 1.0, %v893
      %v895 = vmul.f32 %v892, %v894
      %v896 = vadd.f32 %v892, %v895
      %vm897 = vweird.f32 %v711
      %vm898 = vweird.f32 %v892
      %vm899 = vmor %vm897, %vm898
      %v900 = vsel %vm899, %v892, %v896
      %v901 = vand.u32 2147483647, %v711
      %vm902 = vcmp.eq.f32.partialorder %v901, 8.507059e+37
      %v903 = vand.u32 %v711, 2147483648
      %v904 = vor.u32 1.1754944e-38, %v903
      %v905 = vsel %vm902, %v904, %v900
      %v906 = vmul.f32 1.0, %v905
      %v907 = vmul.f32 %v627, %v726
      %v908 = vmul.f32 %v629, %v741
      %v909 = vmul.f32 %v632, %v756
      %v910 = vmul.f32 %v634, %v771
      %v911 = vmul.f32 %v637, %v786
      %v912 = vmul.f32 %v639, %v801
      %v913 = vmul.f32 %v642, %v816
      %v914 = vmul.f32 %v644, %v831
      %v915 = vmul.f32 %v647, %v846
      %v916 = vmul.f32 %v649, %v861
      %v917 = vmul.f32 %v652, %v876
      %v918 = vmul.f32 %v654, %v891
      %v919 = vmul.f32 %v657, %v906
      %v920 = vld [vmem:[%s1] sm:$0xff]
      %v921 = vld [vmem:[%s1 + $0x8] sm:$0xff]
      %v922 = vld [vmem:[%s1 + $0x10] sm:$0xff]
      %v923 = vld [vmem:[%s1 + $0x18] sm:$0xff]
      %v924 = vld [vmem:[%s1 + $0x20] sm:$0xff]
      %v925 = vld [vmem:[%s1 + $0x28] sm:$0xff]
      %v926 = vld [vmem:[%s1 + $0x30] sm:$0xff]
      %v927 = vld [vmem:[%s1 + $0x38] sm:$0xff]
      %v928 = vld [vmem:[%s1 + $0x40] sm:$0xff]
      %v929 = vld [vmem:[%s1 + $0x48] sm:$0xff]
      %v930 = vld [vmem:[%s1 + $0x50] sm:$0xff]
      %v931 = vld [vmem:[%s1 + $0x58] sm:$0xff]
      %v932 = vld [vmem:[%s1 + $0x60] sm:$0xf]
      %934 = vset.pattern.permute.xlu0 0
      %935 = vperm.xlu0 %934, %v920
      %v936 = vpop.permute.xlu0 %935
      %939 = vset.pattern.permute.xlu0 0
      %940 = vperm.xlu0 %939, %v921
      %v941 = vpop.permute.xlu0 %940
      %944 = vset.pattern.permute.xlu0 0
      %945 = vperm.xlu0 %944, %v922
      %v946 = vpop.permute.xlu0 %945
      %949 = vset.pattern.permute.xlu0 0
      %950 = vperm.xlu0 %949, %v923
      %v951 = vpop.permute.xlu0 %950
      %954 = vset.pattern.permute.xlu0 0
      %955 = vperm.xlu0 %954, %v924
      %v956 = vpop.permute.xlu0 %955
      %959 = vset.pattern.permute.xlu0 0
      %960 = vperm.xlu0 %959, %v925
      %v961 = vpop.permute.xlu0 %960
      %964 = vset.pattern.permute.xlu0 0
      %965 = vperm.xlu0 %964, %v926
      %v966 = vpop.permute.xlu0 %965
      %969 = vset.pattern.permute.xlu0 0
      %970 = vperm.xlu0 %969, %v927
      %v971 = vpop.permute.xlu0 %970
      %974 = vset.pattern.permute.xlu0 0
      %975 = vperm.xlu0 %974, %v928
      %v976 = vpop.permute.xlu0 %975
      %979 = vset.pattern.permute.xlu0 0
      %980 = vperm.xlu0 %979, %v929
      %v981 = vpop.permute.xlu0 %980
      %984 = vset.pattern.permute.xlu0 0
      %985 = vperm.xlu0 %984, %v930
      %v986 = vpop.permute.xlu0 %985
      %989 = vset.pattern.permute.xlu0 0
      %990 = vperm.xlu0 %989, %v931
      %v991 = vpop.permute.xlu0 %990
      %994 = vset.pattern.permute.xlu0 0
      %995 = vperm.xlu0 %994, %v932
      %v996 = vpop.permute.xlu0 %995
      %v998 = vmul.f32 %v907, %v936
      %v999 = vmul.f32 %v908, %v941
      %v1000 = vmul.f32 %v909, %v946
      %v1001 = vmul.f32 %v910, %v951
      %v1002 = vmul.f32 %v911, %v956
      %v1003 = vmul.f32 %v912, %v961
      %v1004 = vmul.f32 %v913, %v966
      %v1005 = vmul.f32 %v914, %v971
      %v1006 = vmul.f32 %v915, %v976
      %v1007 = vmul.f32 %v916, %v981
      %v1008 = vmul.f32 %v917, %v986
      %v1009 = vmul.f32 %v918, %v991
      %v1010 = vmul.f32 %v919, %v996
      %1011 = vst [vmem:[#allocation2 + $0x10] sm:$0xff] %v998
      %1012 = vst [vmem:[#allocation2 + $0x18] sm:$0xff] %v999
      %1013 = vst [vmem:[#allocation2 + $0x20] sm:$0xff] %v1000
      %1014 = vst [vmem:[#allocation2 + $0x28] sm:$0xff] %v1001
      %1015 = vst [vmem:[#allocation2 + $0x30] sm:$0xff] %v1002
      %1016 = vst [vmem:[#allocation2 + $0x38] sm:$0xff] %v1003
      %1017 = vst [vmem:[#allocation2 + $0x40] sm:$0xff] %v1004
      %1018 = vst [vmem:[#allocation2 + $0x48] sm:$0xff] %v1005
      %1019 = vst [vmem:[#allocation2 + $0x50] sm:$0xff] %v1006
      %1020 = vst [vmem:[#allocation2 + $0x58] sm:$0xff] %v1007
      %1021 = vst [vmem:[#allocation2 + $0x60] sm:$0xff] %v1008
      %1022 = vst [vmem:[#allocation2 + $0x68] sm:$0xff] %v1009
      %1023 = vst [vmem:[#allocation2 + $0x70] sm:$0xf] %v1010
      %v1024 = vld [vmem:[%s5] sm:$0xff]
      %v1025 = vld [vmem:[%s5 + $0x8] sm:$0x1]
      %v1026 = vld [vmem:[#allocation2 + $0x5] sm:$0xff]
      %v1027 = vld [vmem:[#allocation2 + $0xd] sm:$0xff]
      %v1028 = vld [vmem:[#allocation2 + $0x15] sm:$0xff]
      %v1029 = vld [vmem:[#allocation2 + $0x1d] sm:$0xff]
      %v1030 = vld [vmem:[#allocation2 + $0x25] sm:$0xff]
      %v1031 = vld [vmem:[#allocation2 + $0x2d] sm:$0xff]
      %v1032 = vld [vmem:[#allocation2 + $0x35] sm:$0xff]
      %v1033 = vld [vmem:[#allocation2 + $0x3d] sm:$0xff]
      %v1034 = vld [vmem:[#allocation2 + $0x45] sm:$0xff]
      %v1035 = vld [vmem:[#allocation2 + $0x4d] sm:$0xff]
      %v1036 = vld [vmem:[#allocation2 + $0x55] sm:$0xff]
      %v1037 = vld [vmem:[#allocation2 + $0x5d] sm:$0xff]
      %v1038 = vld [vmem:[#allocation2 + $0x65] sm:$0xf]
      %v1039 = vperm.slane %v1024, 0
      %v1040 = vmul.f32 %v1026, %v1039
      %v1041 = vmul.f32 %v1027, %v1039
      %v1042 = vmul.f32 %v1028, %v1039
      %v1043 = vmul.f32 %v1029, %v1039
      %v1044 = vmul.f32 %v1030, %v1039
      %v1045 = vmul.f32 %v1031, %v1039
      %v1046 = vmul.f32 %v1032, %v1039
      %v1047 = vmul.f32 %v1033, %v1039
      %v1048 = vmul.f32 %v1034, %v1039
      %v1049 = vmul.f32 %v1035, %v1039
      %v1050 = vmul.f32 %v1036, %v1039
      %v1051 = vmul.f32 %v1037, %v1039
      %v1052 = vmul.f32 %v1038, %v1039
      %v1053 = vld [vmem:[#allocation2 + $0x6] sm:$0xff]
      %v1054 = vld [vmem:[#allocation2 + $0xe] sm:$0xff]
      %v1055 = vld [vmem:[#allocation2 + $0x16] sm:$0xff]
      %v1056 = vld [vmem:[#allocation2 + $0x1e] sm:$0xff]
      %v1057 = vld [vmem:[#allocation2 + $0x26] sm:$0xff]
      %v1058 = vld [vmem:[#allocation2 + $0x2e] sm:$0xff]
      %v1059 = vld [vmem:[#allocation2 + $0x36] sm:$0xff]
      %v1060 = vld [vmem:[#allocation2 + $0x3e] sm:$0xff]
      %v1061 = vld [vmem:[#allocation2 + $0x46] sm:$0xff]
      %v1062 = vld [vmem:[#allocation2 + $0x4e] sm:$0xff]
      %v1063 = vld [vmem:[#allocation2 + $0x56] sm:$0xff]
      %v1064 = vld [vmem:[#allocation2 + $0x5e] sm:$0xff]
      %v1065 = vld [vmem:[#allocation2 + $0x66] sm:$0xf]
      %v1066 = vperm.slane %v1024, 1
      %v1067 = vmul.f32 %v1053, %v1066
      %v1068 = vmul.f32 %v1054, %v1066
      %v1069 = vmul.f32 %v1055, %v1066
      %v1070 = vmul.f32 %v1056, %v1066
      %v1071 = vmul.f32 %v1057, %v1066
      %v1072 = vmul.f32 %v1058, %v1066
      %v1073 = vmul.f32 %v1059, %v1066
      %v1074 = vmul.f32 %v1060, %v1066
      %v1075 = vmul.f32 %v1061, %v1066
      %v1076 = vmul.f32 %v1062, %v1066
      %v1077 = vmul.f32 %v1063, %v1066
      %v1078 = vmul.f32 %v1064, %v1066
      %v1079 = vmul.f32 %v1065, %v1066
      %v1080 = vadd.f32 %v1040, %v1067
      %v1081 = vadd.f32 %v1041, %v1068
      %v1082 = vadd.f32 %v1042, %v1069
      %v1083 = vadd.f32 %v1043, %v1070
      %v1084 = vadd.f32 %v1044, %v1071
      %v1085 = vadd.f32 %v1045, %v1072
      %v1086 = vadd.f32 %v1046, %v1073
      %v1087 = vadd.f32 %v1047, %v1074
      %v1088 = vadd.f32 %v1048, %v1075
      %v1089 = vadd.f32 %v1049, %v1076
      %v1090 = vadd.f32 %v1050, %v1077
      %v1091 = vadd.f32 %v1051, %v1078
      %v1092 = vadd.f32 %v1052, %v1079
      %v1093 = vld [vmem:[#allocation2 + $0x7] sm:$0xff]
      %v1094 = vld [vmem:[#allocation2 + $0xf] sm:$0xff]
      %v1095 = vld [vmem:[#allocation2 + $0x17] sm:$0xff]
      %v1096 = vld [vmem:[#allocation2 + $0x1f] sm:$0xff]
      %v1097 = vld [vmem:[#allocation2 + $0x27] sm:$0xff]
      %v1098 = vld [vmem:[#allocation2 + $0x2f] sm:$0xff]
      %v1099 = vld [vmem:[#allocation2 + $0x37] sm:$0xff]
      %v1100 = vld [vmem:[#allocation2 + $0x3f] sm:$0xff]
      %v1101 = vld [vmem:[#allocation2 + $0x47] sm:$0xff]
      %v1102 = vld [vmem:[#allocation2 + $0x4f] sm:$0xff]
      %v1103 = vld [vmem:[#allocation2 + $0x57] sm:$0xff]
      %v1104 = vld [vmem:[#allocation2 + $0x5f] sm:$0xff]
      %v1105 = vld [vmem:[#allocation2 + $0x67] sm:$0xf]
      %v1106 = vperm.slane %v1024, 2
      %v1107 = vmul.f32 %v1093, %v1106
      %v1108 = vmul.f32 %v1094, %v1106
      %v1109 = vmul.f32 %v1095, %v1106
      %v1110 = vmul.f32 %v1096, %v1106
      %v1111 = vmul.f32 %v1097, %v1106
      %v1112 = vmul.f32 %v1098, %v1106
      %v1113 = vmul.f32 %v1099, %v1106
      %v1114 = vmul.f32 %v1100, %v1106
      %v1115 = vmul.f32 %v1101, %v1106
      %v1116 = vmul.f32 %v1102, %v1106
      %v1117 = vmul.f32 %v1103, %v1106
      %v1118 = vmul.f32 %v1104, %v1106
      %v1119 = vmul.f32 %v1105, %v1106
      %v1120 = vadd.f32 %v1080, %v1107
      %v1121 = vadd.f32 %v1081, %v1108
      %v1122 = vadd.f32 %v1082, %v1109
      %v1123 = vadd.f32 %v1083, %v1110
      %v1124 = vadd.f32 %v1084, %v1111
      %v1125 = vadd.f32 %v1085, %v1112
      %v1126 = vadd.f32 %v1086, %v1113
      %v1127 = vadd.f32 %v1087, %v1114
      %v1128 = vadd.f32 %v1088, %v1115
      %v1129 = vadd.f32 %v1089, %v1116
      %v1130 = vadd.f32 %v1090, %v1117
      %v1131 = vadd.f32 %v1091, %v1118
      %v1132 = vadd.f32 %v1092, %v1119
      %v1133 = vld [vmem:[#allocation2 + $0x67] sm:$0xff]
      %v1134 = vld [vmem:[#allocation2 + $0x6f] sm:$0xf]
      %v1135 = vperm.slane %v1024, 3
      %v1136 = vmul.f32 %v1094, %v1135
      %v1137 = vmul.f32 %v1095, %v1135
      %v1138 = vmul.f32 %v1096, %v1135
      %v1139 = vmul.f32 %v1097, %v1135
      %v1140 = vmul.f32 %v1098, %v1135
      %v1141 = vmul.f32 %v1099, %v1135
      %v1142 = vmul.f32 %v1100, %v1135
      %v1143 = vmul.f32 %v1101, %v1135
      %v1144 = vmul.f32 %v1102, %v1135
      %v1145 = vmul.f32 %v1103, %v1135
      %v1146 = vmul.f32 %v1104, %v1135
      %v1147 = vmul.f32 %v1133, %v1135
      %v1148 = vmul.f32 %v1134, %v1135
      %v1149 = vadd.f32 %v1120, %v1136
      %v1150 = vadd.f32 %v1121, %v1137
      %v1151 = vadd.f32 %v1122, %v1138
      %v1152 = vadd.f32 %v1123, %v1139
      %v1153 = vadd.f32 %v1124, %v1140
      %v1154 = vadd.f32 %v1125, %v1141
      %v1155 = vadd.f32 %v1126, %v1142
      %v1156 = vadd.f32 %v1127, %v1143
      %v1157 = vadd.f32 %v1128, %v1144
      %v1158 = vadd.f32 %v1129, %v1145
      %v1159 = vadd.f32 %v1130, %v1146
      %v1160 = vadd.f32 %v1131, %v1147
      %v1161 = vadd.f32 %v1132, %v1148
      %v1162 = vld [vmem:[#allocation2 + $0x10] sm:$0xff]
      %v1163 = vld [vmem:[#allocation2 + $0x18] sm:$0xff]
      %v1164 = vld [vmem:[#allocation2 + $0x20] sm:$0xff]
      %v1165 = vld [vmem:[#allocation2 + $0x28] sm:$0xff]
      %v1166 = vld [vmem:[#allocation2 + $0x30] sm:$0xff]
      %v1167 = vld [vmem:[#allocation2 + $0x38] sm:$0xff]
      %v1168 = vld [vmem:[#allocation2 + $0x40] sm:$0xff]
      %v1169 = vld [vmem:[#allocation2 + $0x48] sm:$0xff]
      %v1170 = vld [vmem:[#allocation2 + $0x50] sm:$0xff]
      %v1171 = vld [vmem:[#allocation2 + $0x58] sm:$0xff]
      %v1172 = vld [vmem:[#allocation2 + $0x60] sm:$0xff]
      %v1173 = vld [vmem:[#allocation2 + $0x68] sm:$0xff]
      %v1174 = vld [vmem:[#allocation2 + $0x70] sm:$0xf]
      %v1175 = vperm.slane %v1024, 4
      %v1176 = vmul.f32 %v1162, %v1175
      %v1177 = vmul.f32 %v1163, %v1175
      %v1178 = vmul.f32 %v1164, %v1175
      %v1179 = vmul.f32 %v1165, %v1175
      %v1180 = vmul.f32 %v1166, %v1175
      %v1181 = vmul.f32 %v1167, %v1175
      %v1182 = vmul.f32 %v1168, %v1175
      %v1183 = vmul.f32 %v1169, %v1175
      %v1184 = vmul.f32 %v1170, %v1175
      %v1185 = vmul.f32 %v1171, %v1175
      %v1186 = vmul.f32 %v1172, %v1175
      %v1187 = vmul.f32 %v1173, %v1175
      %v1188 = vmul.f32 %v1174, %v1175
      %v1189 = vadd.f32 %v1149, %v1176
      %v1190 = vadd.f32 %v1150, %v1177
      %v1191 = vadd.f32 %v1151, %v1178
      %v1192 = vadd.f32 %v1152, %v1179
      %v1193 = vadd.f32 %v1153, %v1180
      %v1194 = vadd.f32 %v1154, %v1181
      %v1195 = vadd.f32 %v1155, %v1182
      %v1196 = vadd.f32 %v1156, %v1183
      %v1197 = vadd.f32 %v1157, %v1184
      %v1198 = vadd.f32 %v1158, %v1185
      %v1199 = vadd.f32 %v1159, %v1186
      %v1200 = vadd.f32 %v1160, %v1187
      %v1201 = vadd.f32 %v1161, %v1188
      %v1202 = vld [vmem:[#allocation2 + $0x11] sm:$0xff]
      %v1203 = vld [vmem:[#allocation2 + $0x19] sm:$0xff]
      %v1204 = vld [vmem:[#allocation2 + $0x21] sm:$0xff]
      %v1205 = vld [vmem:[#allocation2 + $0x29] sm:$0xff]
      %v1206 = vld [vmem:[#allocation2 + $0x31] sm:$0xff]
      %v1207 = vld [vmem:[#allocation2 + $0x39] sm:$0xff]
      %v1208 = vld [vmem:[#allocation2 + $0x41] sm:$0xff]
      %v1209 = vld [vmem:[#allocation2 + $0x49] sm:$0xff]
      %v1210 = vld [vmem:[#allocation2 + $0x51] sm:$0xff]
      %v1211 = vld [vmem:[#allocation2 + $0x59] sm:$0xff]
      %v1212 = vld [vmem:[#allocation2 + $0x61] sm:$0xff]
      %v1213 = vld [vmem:[#allocation2 + $0x69] sm:$0xff]
      %v1214 = vld [vmem:[#allocation2 + $0x71] sm:$0xf]
      %v1215 = vperm.slane %v1024, 5
      %v1216 = vmul.f32 %v1202, %v1215
      %v1217 = vmul.f32 %v1203, %v1215
      %v1218 = vmul.f32 %v1204, %v1215
      %v1219 = vmul.f32 %v1205, %v1215
      %v1220 = vmul.f32 %v1206, %v1215
      %v1221 = vmul.f32 %v1207, %v1215
      %v1222 = vmul.f32 %v1208, %v1215
      %v1223 = vmul.f32 %v1209, %v1215
      %v1224 = vmul.f32 %v1210, %v1215
      %v1225 = vmul.f32 %v1211, %v1215
      %v1226 = vmul.f32 %v1212, %v1215
      %v1227 = vmul.f32 %v1213, %v1215
      %v1228 = vmul.f32 %v1214, %v1215
      %v1229 = vadd.f32 %v1189, %v1216
      %v1230 = vadd.f32 %v1190, %v1217
      %v1231 = vadd.f32 %v1191, %v1218
      %v1232 = vadd.f32 %v1192, %v1219
      %v1233 = vadd.f32 %v1193, %v1220
      %v1234 = vadd.f32 %v1194, %v1221
      %v1235 = vadd.f32 %v1195, %v1222
      %v1236 = vadd.f32 %v1196, %v1223
      %v1237 = vadd.f32 %v1197, %v1224
      %v1238 = vadd.f32 %v1198, %v1225
      %v1239 = vadd.f32 %v1199, %v1226
      %v1240 = vadd.f32 %v1200, %v1227
      %v1241 = vadd.f32 %v1201, %v1228
      %v1242 = vld [vmem:[#allocation2 + $0x71] sm:$0xff]
      %v1243 = vld [vmem:[#allocation2 + $0x79] sm:$0xf]
      %v1244 = vperm.slane %v1024, 6
      %v1245 = vmul.f32 %v1203, %v1244
      %v1246 = vmul.f32 %v1204, %v1244
      %v1247 = vmul.f32 %v1205, %v1244
      %v1248 = vmul.f32 %v1206, %v1244
      %v1249 = vmul.f32 %v1207, %v1244
      %v1250 = vmul.f32 %v1208, %v1244
      %v1251 = vmul.f32 %v1209, %v1244
      %v1252 = vmul.f32 %v1210, %v1244
      %v1253 = vmul.f32 %v1211, %v1244
      %v1254 = vmul.f32 %v1212, %v1244
      %v1255 = vmul.f32 %v1213, %v1244
      %v1256 = vmul.f32 %v1242, %v1244
      %v1257 = vmul.f32 %v1243, %v1244
      %v1258 = vadd.f32 %v1229, %v1245
      %v1259 = vadd.f32 %v1230, %v1246
      %v1260 = vadd.f32 %v1231, %v1247
      %v1261 = vadd.f32 %v1232, %v1248
      %v1262 = vadd.f32 %v1233, %v1249
      %v1263 = vadd.f32 %v1234, %v1250
      %v1264 = vadd.f32 %v1235, %v1251
      %v1265 = vadd.f32 %v1236, %v1252
      %v1266 = vadd.f32 %v1237, %v1253
      %v1267 = vadd.f32 %v1238, %v1254
      %v1268 = vadd.f32 %v1239, %v1255
      %v1269 = vadd.f32 %v1240, %v1256
      %v1270 = vadd.f32 %v1241, %v1257
      %v1271 = vld [vmem:[#allocation2 + $0x1a] sm:$0xff]
      %v1272 = vld [vmem:[#allocation2 + $0x22] sm:$0xff]
      %v1273 = vld [vmem:[#allocation2 + $0x2a] sm:$0xff]
      %v1274 = vld [vmem:[#allocation2 + $0x32] sm:$0xff]
      %v1275 = vld [vmem:[#allocation2 + $0x3a] sm:$0xff]
      %v1276 = vld [vmem:[#allocation2 + $0x42] sm:$0xff]
      %v1277 = vld [vmem:[#allocation2 + $0x4a] sm:$0xff]
      %v1278 = vld [vmem:[#allocation2 + $0x52] sm:$0xff]
      %v1279 = vld [vmem:[#allocation2 + $0x5a] sm:$0xff]
      %v1280 = vld [vmem:[#allocation2 + $0x62] sm:$0xff]
      %v1281 = vld [vmem:[#allocation2 + $0x6a] sm:$0xff]
      %v1282 = vld [vmem:[#allocation2 + $0x72] sm:$0xff]
      %v1283 = vld [vmem:[#allocation2 + $0x7a] sm:$0xf]
      %v1284 = vperm.slane %v1024, 7
      %v1285 = vmul.f32 %v1271, %v1284
      %v1286 = vmul.f32 %v1272, %v1284
      %v1287 = vmul.f32 %v1273, %v1284
      %v1288 = vmul.f32 %v1274, %v1284
      %v1289 = vmul.f32 %v1275, %v1284
      %v1290 = vmul.f32 %v1276, %v1284
      %v1291 = vmul.f32 %v1277, %v1284
      %v1292 = vmul.f32 %v1278, %v1284
      %v1293 = vmul.f32 %v1279, %v1284
      %v1294 = vmul.f32 %v1280, %v1284
      %v1295 = vmul.f32 %v1281, %v1284
      %v1296 = vmul.f32 %v1282, %v1284
      %v1297 = vmul.f32 %v1283, %v1284
      %v1298 = vadd.f32 %v1258, %v1285
      %v1299 = vadd.f32 %v1259, %v1286
      %v1300 = vadd.f32 %v1260, %v1287
      %v1301 = vadd.f32 %v1261, %v1288
      %v1302 = vadd.f32 %v1262, %v1289
      %v1303 = vadd.f32 %v1263, %v1290
      %v1304 = vadd.f32 %v1264, %v1291
      %v1305 = vadd.f32 %v1265, %v1292
      %v1306 = vadd.f32 %v1266, %v1293
      %v1307 = vadd.f32 %v1267, %v1294
      %v1308 = vadd.f32 %v1268, %v1295
      %v1309 = vadd.f32 %v1269, %v1296
      %v1310 = vadd.f32 %v1270, %v1297
      %v1311 = vld [vmem:[#allocation2 + $0x1b] sm:$0xff]
      %v1312 = vld [vmem:[#allocation2 + $0x23] sm:$0xff]
      %v1313 = vld [vmem:[#allocation2 + $0x2b] sm:$0xff]
      %v1314 = vld [vmem:[#allocation2 + $0x33] sm:$0xff]
      %v1315 = vld [vmem:[#allocation2 + $0x3b] sm:$0xff]
      %v1316 = vld [vmem:[#allocation2 + $0x43] sm:$0xff]
      %v1317 = vld [vmem:[#allocation2 + $0x4b] sm:$0xff]
      %v1318 = vld [vmem:[#allocation2 + $0x53] sm:$0xff]
      %v1319 = vld [vmem:[#allocation2 + $0x5b] sm:$0xff]
      %v1320 = vld [vmem:[#allocation2 + $0x63] sm:$0xff]
      %v1321 = vld [vmem:[#allocation2 + $0x6b] sm:$0xff]
      %v1322 = vld [vmem:[#allocation2 + $0x73] sm:$0xff]
      %v1323 = vld [vmem:[#allocation2 + $0x7b] sm:$0xf]
      %v1324 = vperm.slane %v1025, 0
      %v1325 = vmul.f32 %v1311, %v1324
      %v1326 = vmul.f32 %v1312, %v1324
      %v1327 = vmul.f32 %v1313, %v1324
      %v1328 = vmul.f32 %v1314, %v1324
      %v1329 = vmul.f32 %v1315, %v1324
      %v1330 = vmul.f32 %v1316, %v1324
      %v1331 = vmul.f32 %v1317, %v1324
      %v1332 = vmul.f32 %v1318, %v1324
      %v1333 = vmul.f32 %v1319, %v1324
      %v1334 = vmul.f32 %v1320, %v1324
      %v1335 = vmul.f32 %v1321, %v1324
      %v1336 = vmul.f32 %v1322, %v1324
      %v1337 = vmul.f32 %v1323, %v1324
      %v1338 = vadd.f32 %v1298, %v1325
      %v1339 = vadd.f32 %v1299, %v1326
      %v1340 = vadd.f32 %v1300, %v1327
      %v1341 = vadd.f32 %v1301, %v1328
      %v1342 = vadd.f32 %v1302, %v1329
      %v1343 = vadd.f32 %v1303, %v1330
      %v1344 = vadd.f32 %v1304, %v1331
      %v1345 = vadd.f32 %v1305, %v1332
      %v1346 = vadd.f32 %v1306, %v1333
      %v1347 = vadd.f32 %v1307, %v1334
      %v1348 = vadd.f32 %v1308, %v1335
      %v1349 = vadd.f32 %v1309, %v1336
      %v1350 = vadd.f32 %v1310, %v1337
      %v1351 = vld [vmem:[%s6] sm:$0x1]
      %v1353 = vperm.slane %v1351, 0
      %v1355 = vadd.f32 %v1338, %v1353
      %v1356 = vadd.f32 %v1339, %v1353
      %v1357 = vadd.f32 %v1340, %v1353
      %v1358 = vadd.f32 %v1341, %v1353
      %v1359 = vadd.f32 %v1342, %v1353
      %v1360 = vadd.f32 %v1343, %v1353
      %v1361 = vadd.f32 %v1344, %v1353
      %v1362 = vadd.f32 %v1345, %v1353
      %v1363 = vadd.f32 %v1346, %v1353
      %v1364 = vadd.f32 %v1347, %v1353
      %v1365 = vadd.f32 %v1348, %v1353
      %v1366 = vadd.f32 %v1349, %v1353
      %v1367 = vadd.f32 %v1350, %v1353
      %v1368 = vxor.u32 %v1355, 2147483648
      %v1369 = vxor.u32 %v1356, 2147483648
      %v1370 = vxor.u32 %v1357, 2147483648
      %v1371 = vxor.u32 %v1358, 2147483648
      %v1372 = vxor.u32 %v1359, 2147483648
      %v1373 = vxor.u32 %v1360, 2147483648
      %v1374 = vxor.u32 %v1361, 2147483648
      %v1375 = vxor.u32 %v1362, 2147483648
      %v1376 = vxor.u32 %v1363, 2147483648
      %v1377 = vxor.u32 %v1364, 2147483648
      %v1378 = vxor.u32 %v1365, 2147483648
      %v1379 = vxor.u32 %v1366, 2147483648
      %v1380 = vxor.u32 %v1367, 2147483648
      %v1381 = vmul.f32 %v1368, 1.442695
      %v1382 = vpow.pop %v1381
      %v1383 = vmul.f32 %v1369, 1.442695
      %v1384 = vpow.pop %v1383
      %v1385 = vmul.f32 %v1370, 1.442695
      %v1386 = vpow.pop %v1385
      %v1387 = vmul.f32 %v1371, 1.442695
      %v1388 = vpow.pop %v1387
      %v1389 = vmul.f32 %v1372, 1.442695
      %v1390 = vpow.pop %v1389
      %v1391 = vmul.f32 %v1373, 1.442695
      %v1392 = vpow.pop %v1391
      %v1393 = vmul.f32 %v1374, 1.442695
      %v1394 = vpow.pop %v1393
      %v1395 = vmul.f32 %v1375, 1.442695
      %v1396 = vpow.pop %v1395
      %v1397 = vmul.f32 %v1376, 1.442695
      %v1398 = vpow.pop %v1397
      %v1399 = vmul.f32 %v1377, 1.442695
      %v1400 = vpow.pop %v1399
      %v1401 = vmul.f32 %v1378, 1.442695
      %v1402 = vpow.pop %v1401
      %v1403 = vmul.f32 %v1379, 1.442695
      %v1404 = vpow.pop %v1403
      %v1405 = vmul.f32 %v1380, 1.442695
      %v1406 = vpow.pop %v1405
      %v1407 = vadd.f32 %v1382, 1.0
      %v1408 = vadd.f32 %v1384, 1.0
      %v1409 = vadd.f32 %v1386, 1.0
      %v1410 = vadd.f32 %v1388, 1.0
      %v1411 = vadd.f32 %v1390, 1.0
      %v1412 = vadd.f32 %v1392, 1.0
      %v1413 = vadd.f32 %v1394, 1.0
      %v1414 = vadd.f32 %v1396, 1.0
      %v1415 = vadd.f32 %v1398, 1.0
      %v1416 = vadd.f32 %v1400, 1.0
      %v1417 = vadd.f32 %v1402, 1.0
      %v1418 = vadd.f32 %v1404, 1.0
      %v1419 = vadd.f32 %v1406, 1.0
      %v1420 = vrcp.pop %v1407
      %v1421 = vmul.f32 %v1407, %v1420
      %v1422 = vsub.f32 1.0, %v1421
      %v1423 = vmul.f32 %v1420, %v1422
      %v1424 = vadd.f32 %v1420, %v1423
      %vm1425 = vweird.f32 %v1407
      %vm1426 = vweird.f32 %v1420
      %vm1427 = vmor %vm1425, %vm1426
      %v1428 = vsel %vm1427, %v1420, %v1424
      %v1429 = vand.u32 2147483647, %v1407
      %vm1430 = vcmp.eq.f32.partialorder %v1429, 8.507059e+37
      %v1431 = vand.u32 %v1407, 2147483648
      %v1432 = vor.u32 1.1754944e-38, %v1431
      %v1433 = vsel %vm1430, %v1432, %v1428
      %v1434 = vmul.f32 1.0, %v1433
      %v1435 = vrcp.pop %v1408
      %v1436 = vmul.f32 %v1408, %v1435
      %v1437 = vsub.f32 1.0, %v1436
      %v1438 = vmul.f32 %v1435, %v1437
      %v1439 = vadd.f32 %v1435, %v1438
      %vm1440 = vweird.f32 %v1408
      %vm1441 = vweird.f32 %v1435
      %vm1442 = vmor %vm1440, %vm1441
      %v1443 = vsel %vm1442, %v1435, %v1439
      %v1444 = vand.u32 2147483647, %v1408
      %vm1445 = vcmp.eq.f32.partialorder %v1444, 8.507059e+37
      %v1446 = vand.u32 %v1408, 2147483648
      %v1447 = vor.u32 1.1754944e-38, %v1446
      %v1448 = vsel %vm1445, %v1447, %v1443
      %v1449 = vmul.f32 1.0, %v1448
      %v1450 = vrcp.pop %v1409
      %v1451 = vmul.f32 %v1409, %v1450
      %v1452 = vsub.f32 1.0, %v1451
      %v1453 = vmul.f32 %v1450, %v1452
      %v1454 = vadd.f32 %v1450, %v1453
      %vm1455 = vweird.f32 %v1409
      %vm1456 = vweird.f32 %v1450
      %vm1457 = vmor %vm1455, %vm1456
      %v1458 = vsel %vm1457, %v1450, %v1454
      %v1459 = vand.u32 2147483647, %v1409
      %vm1460 = vcmp.eq.f32.partialorder %v1459, 8.507059e+37
      %v1461 = vand.u32 %v1409, 2147483648
      %v1462 = vor.u32 1.1754944e-38, %v1461
      %v1463 = vsel %vm1460, %v1462, %v1458
      %v1464 = vmul.f32 1.0, %v1463
      %v1465 = vrcp.pop %v1410
      %v1466 = vmul.f32 %v1410, %v1465
      %v1467 = vsub.f32 1.0, %v1466
      %v1468 = vmul.f32 %v1465, %v1467
      %v1469 = vadd.f32 %v1465, %v1468
      %vm1470 = vweird.f32 %v1410
      %vm1471 = vweird.f32 %v1465
      %vm1472 = vmor %vm1470, %vm1471
      %v1473 = vsel %vm1472, %v1465, %v1469
      %v1474 = vand.u32 2147483647, %v1410
      %vm1475 = vcmp.eq.f32.partialorder %v1474, 8.507059e+37
      %v1476 = vand.u32 %v1410, 2147483648
      %v1477 = vor.u32 1.1754944e-38, %v1476
      %v1478 = vsel %vm1475, %v1477, %v1473
      %v1479 = vmul.f32 1.0, %v1478
      %v1480 = vrcp.pop %v1411
      %v1481 = vmul.f32 %v1411, %v1480
      %v1482 = vsub.f32 1.0, %v1481
      %v1483 = vmul.f32 %v1480, %v1482
      %v1484 = vadd.f32 %v1480, %v1483
      %vm1485 = vweird.f32 %v1411
      %vm1486 = vweird.f32 %v1480
      %vm1487 = vmor %vm1485, %vm1486
      %v1488 = vsel %vm1487, %v1480, %v1484
      %v1489 = vand.u32 2147483647, %v1411
      %vm1490 = vcmp.eq.f32.partialorder %v1489, 8.507059e+37
      %v1491 = vand.u32 %v1411, 2147483648
      %v1492 = vor.u32 1.1754944e-38, %v1491
      %v1493 = vsel %vm1490, %v1492, %v1488
      %v1494 = vmul.f32 1.0, %v1493
      %v1495 = vrcp.pop %v1412
      %v1496 = vmul.f32 %v1412, %v1495
      %v1497 = vsub.f32 1.0, %v1496
      %v1498 = vmul.f32 %v1495, %v1497
      %v1499 = vadd.f32 %v1495, %v1498
      %vm1500 = vweird.f32 %v1412
      %vm1501 = vweird.f32 %v1495
      %vm1502 = vmor %vm1500, %vm1501
      %v1503 = vsel %vm1502, %v1495, %v1499
      %v1504 = vand.u32 2147483647, %v1412
      %vm1505 = vcmp.eq.f32.partialorder %v1504, 8.507059e+37
      %v1506 = vand.u32 %v1412, 2147483648
      %v1507 = vor.u32 1.1754944e-38, %v1506
      %v1508 = vsel %vm1505, %v1507, %v1503
      %v1509 = vmul.f32 1.0, %v1508
      %v1510 = vrcp.pop %v1413
      %v1511 = vmul.f32 %v1413, %v1510
      %v1512 = vsub.f32 1.0, %v1511
      %v1513 = vmul.f32 %v1510, %v1512
      %v1514 = vadd.f32 %v1510, %v1513
      %vm1515 = vweird.f32 %v1413
      %vm1516 = vweird.f32 %v1510
      %vm1517 = vmor %vm1515, %vm1516
      %v1518 = vsel %vm1517, %v1510, %v1514
      %v1519 = vand.u32 2147483647, %v1413
      %vm1520 = vcmp.eq.f32.partialorder %v1519, 8.507059e+37
      %v1521 = vand.u32 %v1413, 2147483648
      %v1522 = vor.u32 1.1754944e-38, %v1521
      %v1523 = vsel %vm1520, %v1522, %v1518
      %v1524 = vmul.f32 1.0, %v1523
      %v1525 = vrcp.pop %v1414
      %v1526 = vmul.f32 %v1414, %v1525
      %v1527 = vsub.f32 1.0, %v1526
      %v1528 = vmul.f32 %v1525, %v1527
      %v1529 = vadd.f32 %v1525, %v1528
      %vm1530 = vweird.f32 %v1414
      %vm1531 = vweird.f32 %v1525
      %vm1532 = vmor %vm1530, %vm1531
      %v1533 = vsel %vm1532, %v1525, %v1529
      %v1534 = vand.u32 2147483647, %v1414
      %vm1535 = vcmp.eq.f32.partialorder %v1534, 8.507059e+37
      %v1536 = vand.u32 %v1414, 2147483648
      %v1537 = vor.u32 1.1754944e-38, %v1536
      %v1538 = vsel %vm1535, %v1537, %v1533
      %v1539 = vmul.f32 1.0, %v1538
      %v1540 = vrcp.pop %v1415
      %v1541 = vmul.f32 %v1415, %v1540
      %v1542 = vsub.f32 1.0, %v1541
      %v1543 = vmul.f32 %v1540, %v1542
      %v1544 = vadd.f32 %v1540, %v1543
      %vm1545 = vweird.f32 %v1415
      %vm1546 = vweird.f32 %v1540
      %vm1547 = vmor %vm1545, %vm1546
      %v1548 = vsel %vm1547, %v1540, %v1544
      %v1549 = vand.u32 2147483647, %v1415
      %vm1550 = vcmp.eq.f32.partialorder %v1549, 8.507059e+37
      %v1551 = vand.u32 %v1415, 2147483648
      %v1552 = vor.u32 1.1754944e-38, %v1551
      %v1553 = vsel %vm1550, %v1552, %v1548
      %v1554 = vmul.f32 1.0, %v1553
      %v1555 = vrcp.pop %v1416
      %v1556 = vmul.f32 %v1416, %v1555
      %v1557 = vsub.f32 1.0, %v1556
      %v1558 = vmul.f32 %v1555, %v1557
      %v1559 = vadd.f32 %v1555, %v1558
      %vm1560 = vweird.f32 %v1416
      %vm1561 = vweird.f32 %v1555
      %vm1562 = vmor %vm1560, %vm1561
      %v1563 = vsel %vm1562, %v1555, %v1559
      %v1564 = vand.u32 2147483647, %v1416
      %vm1565 = vcmp.eq.f32.partialorder %v1564, 8.507059e+37
      %v1566 = vand.u32 %v1416, 2147483648
      %v1567 = vor.u32 1.1754944e-38, %v1566
      %v1568 = vsel %vm1565, %v1567, %v1563
      %v1569 = vmul.f32 1.0, %v1568
      %v1570 = vrcp.pop %v1417
      %v1571 = vmul.f32 %v1417, %v1570
      %v1572 = vsub.f32 1.0, %v1571
      %v1573 = vmul.f32 %v1570, %v1572
      %v1574 = vadd.f32 %v1570, %v1573
      %vm1575 = vweird.f32 %v1417
      %vm1576 = vweird.f32 %v1570
      %vm1577 = vmor %vm1575, %vm1576
      %v1578 = vsel %vm1577, %v1570, %v1574
      %v1579 = vand.u32 2147483647, %v1417
      %vm1580 = vcmp.eq.f32.partialorder %v1579, 8.507059e+37
      %v1581 = vand.u32 %v1417, 2147483648
      %v1582 = vor.u32 1.1754944e-38, %v1581
      %v1583 = vsel %vm1580, %v1582, %v1578
      %v1584 = vmul.f32 1.0, %v1583
      %v1585 = vrcp.pop %v1418
      %v1586 = vmul.f32 %v1418, %v1585
      %v1587 = vsub.f32 1.0, %v1586
      %v1588 = vmul.f32 %v1585, %v1587
      %v1589 = vadd.f32 %v1585, %v1588
      %vm1590 = vweird.f32 %v1418
      %vm1591 = vweird.f32 %v1585
      %vm1592 = vmor %vm1590, %vm1591
      %v1593 = vsel %vm1592, %v1585, %v1589
      %v1594 = vand.u32 2147483647, %v1418
      %vm1595 = vcmp.eq.f32.partialorder %v1594, 8.507059e+37
      %v1596 = vand.u32 %v1418, 2147483648
      %v1597 = vor.u32 1.1754944e-38, %v1596
      %v1598 = vsel %vm1595, %v1597, %v1593
      %v1599 = vmul.f32 1.0, %v1598
      %v1600 = vrcp.pop %v1419
      %v1601 = vmul.f32 %v1419, %v1600
      %v1602 = vsub.f32 1.0, %v1601
      %v1603 = vmul.f32 %v1600, %v1602
      %v1604 = vadd.f32 %v1600, %v1603
      %vm1605 = vweird.f32 %v1419
      %vm1606 = vweird.f32 %v1600
      %vm1607 = vmor %vm1605, %vm1606
      %v1608 = vsel %vm1607, %v1600, %v1604
      %v1609 = vand.u32 2147483647, %v1419
      %vm1610 = vcmp.eq.f32.partialorder %v1609, 8.507059e+37
      %v1611 = vand.u32 %v1419, 2147483648
      %v1612 = vor.u32 1.1754944e-38, %v1611
      %v1613 = vsel %vm1610, %v1612, %v1608
      %v1614 = vmul.f32 1.0, %v1613
      %v1615 = vmul.f32 %v1355, %v1434
      %v1616 = vmul.f32 %v1356, %v1449
      %v1617 = vmul.f32 %v1357, %v1464
      %v1618 = vmul.f32 %v1358, %v1479
      %v1619 = vmul.f32 %v1359, %v1494
      %v1620 = vmul.f32 %v1360, %v1509
      %v1621 = vmul.f32 %v1361, %v1524
      %v1622 = vmul.f32 %v1362, %v1539
      %v1623 = vmul.f32 %v1363, %v1554
      %v1624 = vmul.f32 %v1364, %v1569
      %v1625 = vmul.f32 %v1365, %v1584
      %v1626 = vmul.f32 %v1366, %v1599
      %v1627 = vmul.f32 %v1367, %v1614
      %v1628 = vpack.c.bf16 %v1616, %v1615
      %v1629 = vpack.c.bf16 %v1618, %v1617
      %v1630 = vpack.c.bf16 %v1620, %v1619
      %v1631 = vpack.c.bf16 %v1622, %v1621
      %v1632 = vpack.c.bf16 %v1624, %v1623
      %v1633 = vpack.c.bf16 %v1626, %v1625
      %v1634 = vpack.c.bf16 %v1627, %v1627
      %v1635 = vld [vmem:[%s2] sm:$0x1]
      %vm1636 = vcmask 818176
      %v1638 = vsel %vm1636, %v1635, 0
      %vm1640 = vcmask 1041408
      %v1642 = vsel %vm1640, %v1634, 0
      %1644 = vmatpush.bf16.msra.mxu0 0
      %1645 = vmatpush.bf16.msra.mxu0 %v1642
      %1646 = vmatpush.bf16.msra.mxu0 %v1633
      %1647 = vmatpush.bf16.msra.mxu0 %v1632
      %1648 = vmatpush.bf16.msra.mxu0 %v1631
      %1649 = vmatpush.bf16.msra.mxu0 %v1630
      %1650 = vmatpush.bf16.msra.mxu0 %v1629
      %1651 = vmatpush.bf16.msra.mxu0 %v1628
      %1652 = vmatmul.bf16.gmra.mxu0 %v1638
      %v1653 = vpop.f32.mrf.mxu0
      %v1654 = vadd.f32 0.0, %v1653
      %v1655 = vpop.f32.mrf.mxu0
      %1656 = vdwg.mxu0
      %v1657 = vpack.c.bf16 %v1654, %v1654
      %v1658 = vld [vmem:[%s7] sm:$0xf]
      %v1659 = vld [vmem:[%s7 + $0x4] sm:$0xf]
      %v1660 = vld [vmem:[%s7 + $0x8] sm:$0xf]
      %v1661 = vld [vmem:[%s7 + $0xc] sm:$0xf]
      %v1662 = vld [vmem:[%s7 + $0x10] sm:$0xf]
      %v1663 = vld [vmem:[%s7 + $0x14] sm:$0xf]
      %v1664 = vld [vmem:[%s7 + $0x18] sm:$0xf]
      %v1665 = vld [vmem:[%s7 + $0x1c] sm:$0xf]
      %v1666 = vld [vmem:[%s7 + $0x20] sm:$0xf]
      %v1667 = vld [vmem:[%s7 + $0x24] sm:$0xf]
      %v1668 = vld [vmem:[%s7 + $0x28] sm:$0xf]
      %v1669 = vld [vmem:[%s7 + $0x2c] sm:$0xf]
      %v1670 = vld [vmem:[%s7 + $0x30] sm:$0xf]
      %v1671 = vld [vmem:[%s7 + $0x34] sm:$0xf]
      %v1672 = vld [vmem:[%s7 + $0x38] sm:$0xf]
      %v1673 = vld [vmem:[%s7 + $0x3c] sm:$0xf]
      %v1674 = vld [vmem:[%s8] sm:$0x1]
      %v1691 = vunpack.c.l.b16 %v1658
      %v1692 = vunpack.c.l.b16 %v1659
      %v1693 = vunpack.c.l.b16 %v1660
      %v1694 = vunpack.c.l.b16 %v1661
      %v1695 = vunpack.c.l.b16 %v1662
      %v1696 = vunpack.c.l.b16 %v1663
      %v1697 = vunpack.c.l.b16 %v1664
      %v1698 = vunpack.c.l.b16 %v1665
      %v1699 = vunpack.c.l.b16 %v1666
      %v1700 = vunpack.c.l.b16 %v1667
      %v1701 = vunpack.c.l.b16 %v1668
      %v1702 = vunpack.c.l.b16 %v1669
      %v1703 = vunpack.c.l.b16 %v1670
      %v1704 = vunpack.c.l.b16 %v1671
      %v1705 = vunpack.c.l.b16 %v1672
      %v1706 = vunpack.c.l.b16 %v1673
      %v1707 = vpack.c.b16 %v1692, %v1691
      %v1708 = vpack.c.b16 %v1694, %v1693
      %v1709 = vpack.c.b16 %v1696, %v1695
      %v1710 = vpack.c.b16 %v1698, %v1697
      %v1711 = vpack.c.b16 %v1700, %v1699
      %v1712 = vpack.c.b16 %v1702, %v1701
      %v1713 = vpack.c.b16 %v1704, %v1703
      %v1714 = vpack.c.b16 %v1706, %v1705
      %1723 = vmatpush.bf16.msra.mxu0 %v1714
      %1724 = vmatpush.bf16.msra.mxu0 %v1713
      %1725 = vmatpush.bf16.msra.mxu0 %v1712
      %1726 = vmatpush.bf16.msra.mxu0 %v1711
      %1727 = vmatpush.bf16.msra.mxu0 %v1710
      %1728 = vmatpush.bf16.msra.mxu0 %v1709
      %1729 = vmatpush.bf16.msra.mxu0 %v1708
      %1730 = vmatpush.bf16.msra.mxu0 %v1707
      %1731 = vmatmul.bf16.gmra.mxu0 %v1657
      %v1732 = vpop.f32.mrf.mxu0
      %v1733 = vadd.f32 %v1674, %v1732
      %v1734 = vpop.f32.mrf.mxu0
      %1735 = vdwg.mxu0
      %v1736 = vxor.u32 %v1733, 2147483648
      %v1737 = vmul.f32 %v1736, 1.442695
      %v1738 = vpow.pop %v1737
      %v1739 = vadd.f32 %v1738, 1.0
      %v1740 = vrcp.pop %v1739
      %v1741 = vmul.f32 %v1739, %v1740
      %v1742 = vsub.f32 1.0, %v1741
      %v1743 = vmul.f32 %v1740, %v1742
      %v1744 = vadd.f32 %v1740, %v1743
      %vm1745 = vweird.f32 %v1739
      %vm1746 = vweird.f32 %v1740
      %vm1747 = vmor %vm1745, %vm1746
      %v1748 = vsel %vm1747, %v1740, %v1744
      %v1749 = vand.u32 2147483647, %v1739
      %vm1750 = vcmp.eq.f32.partialorder %v1749, 8.507059e+37
      %v1751 = vand.u32 %v1739, 2147483648
      %v1752 = vor.u32 1.1754944e-38, %v1751
      %v1753 = vsel %vm1750, %v1752, %v1748
      %v1754 = vmul.f32 1.0, %v1753
      %v1755 = vmul.f32 %v1733, %v1754
      %v1756 = vpack.c.bf16 %v1755, %v1755
      %v1757 = vld [vmem:[%s9] sm:$0xf]
      %v1758 = vld [vmem:[%s9 + $0x4] sm:$0xf]
      %v1759 = vld [vmem:[%s9 + $0x8] sm:$0xf]
      %v1760 = vld [vmem:[%s9 + $0xc] sm:$0xf]
      %v1761 = vld [vmem:[%s10] sm:$0x1]
      %v1766 = vunpack.c.l.b16 %v1757
      %v1767 = vunpack.c.l.b16 %v1758
      %v1768 = vunpack.c.l.b16 %v1759
      %v1769 = vunpack.c.l.b16 %v1760
      %v1770 = vpack.c.b16 %v1767, %v1766
      %v1771 = vpack.c.b16 %v1769, %v1768
      %vm1774 = vcmask 261120
      %v1776 = vsel %vm1774, %v1756, 0
      %1778 = vmatpush.bf16.msra.mxu0 0
      %1779 = vmatpush.bf16.msra.mxu0 0
      %1780 = vmatpush.bf16.msra.mxu0 0
      %1781 = vmatpush.bf16.msra.mxu0 0
      %1782 = vmatpush.bf16.msra.mxu0 0
      %1783 = vmatpush.bf16.msra.mxu0 0
      %1784 = vmatpush.bf16.msra.mxu0 %v1771
      %1785 = vmatpush.bf16.msra.mxu0 %v1770
      %1786 = vmatmul.bf16.gmra.mxu0 %v1776
      %v1787 = vpop.f32.mrf.mxu0
      %v1788 = vadd.f32 %v1761, %v1787
      %v1789 = vpop.f32.mrf.mxu0
      %1790 = vdwg.mxu0
      %v1791 = vxor.u32 %v1788, 2147483648
      %v1792 = vmul.f32 %v1791, 1.442695
      %v1793 = vpow.pop %v1792
      %v1794 = vadd.f32 %v1793, 1.0
      %v1795 = vrcp.pop %v1794
      %v1796 = vmul.f32 %v1794, %v1795
      %v1797 = vsub.f32 1.0, %v1796
      %v1798 = vmul.f32 %v1795, %v1797
      %v1799 = vadd.f32 %v1795, %v1798
      %vm1800 = vweird.f32 %v1794
      %vm1801 = vweird.f32 %v1795
      %vm1802 = vmor %vm1800, %vm1801
      %v1803 = vsel %vm1802, %v1795, %v1799
      %v1804 = vand.u32 2147483647, %v1794
      %vm1805 = vcmp.eq.f32.partialorder %v1804, 8.507059e+37
      %v1806 = vand.u32 %v1794, 2147483648
      %v1807 = vor.u32 1.1754944e-38, %v1806
      %v1808 = vsel %vm1805, %v1807, %v1803
      %v1809 = vmul.f32 1.0, %v1808
      %v1810 = vperm.slane %v1809, 0
      %v1811 = vmul.f32 %v1615, %v1810
      %v1812 = vmul.f32 %v1616, %v1810
      %v1813 = vmul.f32 %v1617, %v1810
      %v1814 = vmul.f32 %v1618, %v1810
      %v1815 = vmul.f32 %v1619, %v1810
      %v1816 = vmul.f32 %v1620, %v1810
      %v1817 = vmul.f32 %v1621, %v1810
      %v1818 = vmul.f32 %v1622, %v1810
      %v1819 = vmul.f32 %v1623, %v1810
      %v1820 = vmul.f32 %v1624, %v1810
      %v1821 = vmul.f32 %v1625, %v1810
      %v1822 = vmul.f32 %v1626, %v1810
      %v1823 = vmul.f32 %v1627, %v1810
      %v1824 = vpack.c.bf16 %v1812, %v1811
      %v1825 = vpack.c.bf16 %v1814, %v1813
      %v1826 = vpack.c.bf16 %v1816, %v1815
      %v1827 = vpack.c.bf16 %v1818, %v1817
      %v1828 = vpack.c.bf16 %v1820, %v1819
      %v1829 = vpack.c.bf16 %v1822, %v1821
      %v1830 = vpack.c.bf16 %v1823, %v1823
      %v1831 = vld [vmem:[%s11] sm:$0xff]
      %v1832 = vld [vmem:[%s11 + $0x8] sm:$0xff]
      %v1833 = vld [vmem:[%s11 + $0x10] sm:$0xff]
      %v1834 = vld [vmem:[%s11 + $0x18] sm:$0xff]
      %v1835 = vld [vmem:[%s11 + $0x20] sm:$0xff]
      %v1836 = vld [vmem:[%s11 + $0x28] sm:$0xff]
      %v1837 = vld [vmem:[%s11 + $0x30] sm:$0xff]
      %v1838 = vld [vmem:[%s11 + $0x38] sm:$0xff]
      %v1839 = vld [vmem:[%s11 + $0x40] sm:$0xff]
      %v1840 = vld [vmem:[%s11 + $0x48] sm:$0xff]
      %v1841 = vld [vmem:[%s11 + $0x50] sm:$0xff]
      %v1842 = vld [vmem:[%s11 + $0x58] sm:$0xff]
      %v1843 = vld [vmem:[%s11 + $0x60] sm:$0xff]
      %v1844 = vld [vmem:[%s11 + $0x68] sm:$0xff]
      %v1845 = vld [vmem:[%s11 + $0x70] sm:$0xff]
      %v1846 = vld [vmem:[%s11 + $0x78] sm:$0xff]
      %v1847 = vld [vmem:[%s12] sm:$0x3]
      %v1849 = vperm.slane %v1847, 0
      %v1850 = vperm.slane %v1847, 1
      %v1869 = vunpack.c.l.b16 %v1831
      %v1870 = vunpack.c.h.b16 %v1831
      %v1871 = vunpack.c.l.b16 %v1832
      %v1872 = vunpack.c.h.b16 %v1832
      %v1873 = vunpack.c.l.b16 %v1833
      %v1874 = vunpack.c.h.b16 %v1833
      %v1875 = vunpack.c.l.b16 %v1834
      %v1876 = vunpack.c.h.b16 %v1834
      %v1877 = vunpack.c.l.b16 %v1835
      %v1878 = vunpack.c.h.b16 %v1835
      %v1879 = vunpack.c.l.b16 %v1836
      %v1880 = vunpack.c.h.b16 %v1836
      %v1881 = vunpack.c.l.b16 %v1837
      %v1882 = vunpack.c.h.b16 %v1837
      %v1883 = vunpack.c.l.b16 %v1838
      %v1884 = vunpack.c.h.b16 %v1838
      %v1885 = vunpack.c.l.b16 %v1839
      %v1886 = vunpack.c.h.b16 %v1839
      %v1887 = vunpack.c.l.b16 %v1840
      %v1888 = vunpack.c.h.b16 %v1840
      %v1889 = vunpack.c.l.b16 %v1841
      %v1890 = vunpack.c.h.b16 %v1841
      %v1891 = vunpack.c.l.b16 %v1842
      %v1892 = vunpack.c.h.b16 %v1842
      %v1893 = vunpack.c.l.b16 %v1843
      %v1894 = vunpack.c.h.b16 %v1843
      %v1895 = vunpack.c.l.b16 %v1844
      %v1896 = vunpack.c.h.b16 %v1844
      %v1897 = vunpack.c.l.b16 %v1845
      %v1898 = vunpack.c.h.b16 %v1845
      %v1899 = vunpack.c.l.b16 %v1846
      %v1900 = vunpack.c.h.b16 %v1846
      %v1901 = vpack.c.b16 %v1871, %v1869
      %v1902 = vpack.c.b16 %v1872, %v1870
      %v1903 = vpack.c.b16 %v1875, %v1873
      %v1904 = vpack.c.b16 %v1876, %v1874
      %v1905 = vpack.c.b16 %v1879, %v1877
      %v1906 = vpack.c.b16 %v1880, %v1878
      %v1907 = vpack.c.b16 %v1883, %v1881
      %v1908 = vpack.c.b16 %v1884, %v1882
      %v1909 = vpack.c.b16 %v1887, %v1885
      %v1910 = vpack.c.b16 %v1888, %v1886
      %v1911 = vpack.c.b16 %v1891, %v1889
      %v1912 = vpack.c.b16 %v1892, %v1890
      %v1913 = vpack.c.b16 %v1895, %v1893
      %v1914 = vpack.c.b16 %v1896, %v1894
      %v1915 = vpack.c.b16 %v1899, %v1897
      %v1916 = vpack.c.b16 %v1900, %v1898
      %1933 = vmatpush.bf16.msra.mxu0 %v1915
      %1934 = vmatpush.bf16.msra.mxu0 %v1913
      %1935 = vmatpush.bf16.msra.mxu0 %v1911
      %1936 = vmatpush.bf16.msra.mxu0 %v1909
      %1937 = vmatpush.bf16.msra.mxu0 %v1907
      %1938 = vmatpush.bf16.msra.mxu0 %v1905
      %1939 = vmatpush.bf16.msra.mxu0 %v1903
      %1940 = vmatpush.bf16.msra.mxu0 %v1901
      %1941 = vmatmul.bf16.gmra.mxu0 %v1824
      %v1942 = vpop.f32.mrf.mxu0
      %v1943 = vadd.f32 %v1849, %v1942
      %v1944 = vpop.f32.mrf.mxu0
      %v1945 = vadd.f32 %v1849, %v1944
      %1946 = vmatmul.bf16.gmra.mxu0 %v1825
      %v1947 = vpop.f32.mrf.mxu0
      %v1948 = vadd.f32 %v1849, %v1947
      %v1949 = vpop.f32.mrf.mxu0
      %v1950 = vadd.f32 %v1849, %v1949
      %1951 = vmatmul.bf16.gmra.mxu0 %v1826
      %v1952 = vpop.f32.mrf.mxu0
      %v1953 = vadd.f32 %v1849, %v1952
      %v1954 = vpop.f32.mrf.mxu0
      %v1955 = vadd.f32 %v1849, %v1954
      %1956 = vmatmul.bf16.gmra.mxu0 %v1827
      %v1957 = vpop.f32.mrf.mxu0
      %v1958 = vadd.f32 %v1849, %v1957
      %v1959 = vpop.f32.mrf.mxu0
      %v1960 = vadd.f32 %v1849, %v1959
      %1961 = vmatmul.bf16.gmra.mxu0 %v1828
      %v1962 = vpop.f32.mrf.mxu0
      %v1963 = vadd.f32 %v1849, %v1962
      %v1964 = vpop.f32.mrf.mxu0
      %v1965 = vadd.f32 %v1849, %v1964
      %1966 = vmatmul.bf16.gmra.mxu0 %v1829
      %v1967 = vpop.f32.mrf.mxu0
      %v1968 = vadd.f32 %v1849, %v1967
      %v1969 = vpop.f32.mrf.mxu0
      %v1970 = vadd.f32 %v1849, %v1969
      %1971 = vmatmul.bf16.gmra.mxu0 %v1830
      %v1972 = vpop.f32.mrf.mxu0
      %v1973 = vadd.f32 %v1849, %v1972
      %v1974 = vpop.f32.mrf.mxu0
      %1975 = vdwg.mxu0
      %1976 = vmatpush.bf16.msra.mxu0 %v1916
      %1977 = vmatpush.bf16.msra.mxu0 %v1914
      %1978 = vmatpush.bf16.msra.mxu0 %v1912
      %1979 = vmatpush.bf16.msra.mxu0 %v1910
      %1980 = vmatpush.bf16.msra.mxu0 %v1908
      %1981 = vmatpush.bf16.msra.mxu0 %v1906
      %1982 = vmatpush.bf16.msra.mxu0 %v1904
      %1983 = vmatpush.bf16.msra.mxu0 %v1902
      %1984 = vmatmul.bf16.gmra.mxu0 %v1824
      %v1985 = vpop.f32.mrf.mxu0
      %v1986 = vadd.f32 %v1850, %v1985
      %v1987 = vpop.f32.mrf.mxu0
      %v1988 = vadd.f32 %v1850, %v1987
      %1989 = vmatmul.bf16.gmra.mxu0 %v1825
      %v1990 = vpop.f32.mrf.mxu0
      %v1991 = vadd.f32 %v1850, %v1990
      %v1992 = vpop.f32.mrf.mxu0
      %v1993 = vadd.f32 %v1850, %v1992
      %1994 = vmatmul.bf16.gmra.mxu0 %v1826
      %v1995 = vpop.f32.mrf.mxu0
      %v1996 = vadd.f32 %v1850, %v1995
      %v1997 = vpop.f32.mrf.mxu0
      %v1998 = vadd.f32 %v1850, %v1997
      %1999 = vmatmul.bf16.gmra.mxu0 %v1827
      %v2000 = vpop.f32.mrf.mxu0
      %v2001 = vadd.f32 %v1850, %v2000
      %v2002 = vpop.f32.mrf.mxu0
      %v2003 = vadd.f32 %v1850, %v2002
      %2004 = vmatmul.bf16.gmra.mxu0 %v1828
      %v2005 = vpop.f32.mrf.mxu0
      %v2006 = vadd.f32 %v1850, %v2005
      %v2007 = vpop.f32.mrf.mxu0
      %v2008 = vadd.f32 %v1850, %v2007
      %2009 = vmatmul.bf16.gmra.mxu0 %v1829
      %v2010 = vpop.f32.mrf.mxu0
      %v2011 = vadd.f32 %v1850, %v2010
      %v2012 = vpop.f32.mrf.mxu0
      %v2013 = vadd.f32 %v1850, %v2012
      %2014 = vmatmul.bf16.gmra.mxu0 %v1830
      %v2015 = vpop.f32.mrf.mxu0
      %v2016 = vadd.f32 %v1850, %v2015
      %v2017 = vpop.f32.mrf.mxu0
      %2018 = vdwg.mxu0
      %v2019 = vxor.u32 %v1943, 2147483648
      %v2020 = vxor.u32 %v1986, 2147483648
      %v2021 = vxor.u32 %v1945, 2147483648
      %v2022 = vxor.u32 %v1988, 2147483648
      %v2023 = vxor.u32 %v1948, 2147483648
      %v2024 = vxor.u32 %v1991, 2147483648
      %v2025 = vxor.u32 %v1950, 2147483648
      %v2026 = vxor.u32 %v1993, 2147483648
      %v2027 = vxor.u32 %v1953, 2147483648
      %v2028 = vxor.u32 %v1996, 2147483648
      %v2029 = vxor.u32 %v1955, 2147483648
      %v2030 = vxor.u32 %v1998, 2147483648
      %v2031 = vxor.u32 %v1958, 2147483648
      %v2032 = vxor.u32 %v2001, 2147483648
      %v2033 = vxor.u32 %v1960, 2147483648
      %v2034 = vxor.u32 %v2003, 2147483648
      %v2035 = vxor.u32 %v1963, 2147483648
      %v2036 = vxor.u32 %v2006, 2147483648
      %v2037 = vxor.u32 %v1965, 2147483648
      %v2038 = vxor.u32 %v2008, 2147483648
      %v2039 = vxor.u32 %v1968, 2147483648
      %v2040 = vxor.u32 %v2011, 2147483648
      %v2041 = vxor.u32 %v1970, 2147483648
      %v2042 = vxor.u32 %v2013, 2147483648
      %v2043 = vxor.u32 %v1973, 2147483648
      %v2044 = vxor.u32 %v2016, 2147483648
      %v2045 = vmul.f32 %v2019, 1.442695
      %v2046 = vpow.pop %v2045
      %v2047 = vmul.f32 %v2020, 1.442695
      %v2048 = vpow.pop %v2047
      %v2049 = vmul.f32 %v2021, 1.442695
      %v2050 = vpow.pop %v2049
      %v2051 = vmul.f32 %v2022, 1.442695
      %v2052 = vpow.pop %v2051
      %v2053 = vmul.f32 %v2023, 1.442695
      %v2054 = vpow.pop %v2053
      %v2055 = vmul.f32 %v2024, 1.442695
      %v2056 = vpow.pop %v2055
      %v2057 = vmul.f32 %v2025, 1.442695
      %v2058 = vpow.pop %v2057
      %v2059 = vmul.f32 %v2026, 1.442695
      %v2060 = vpow.pop %v2059
      %v2061 = vmul.f32 %v2027, 1.442695
      %v2062 = vpow.pop %v2061
      %v2063 = vmul.f32 %v2028, 1.442695
      %v2064 = vpow.pop %v2063
      %v2065 = vmul.f32 %v2029, 1.442695
      %v2066 = vpow.pop %v2065
      %v2067 = vmul.f32 %v2030, 1.442695
      %v2068 = vpow.pop %v2067
      %v2069 = vmul.f32 %v2031, 1.442695
      %v2070 = vpow.pop %v2069
      %v2071 = vmul.f32 %v2032, 1.442695
      %v2072 = vpow.pop %v2071
      %v2073 = vmul.f32 %v2033, 1.442695
      %v2074 = vpow.pop %v2073
      %v2075 = vmul.f32 %v2034, 1.442695
      %v2076 = vpow.pop %v2075
      %v2077 = vmul.f32 %v2035, 1.442695
      %v2078 = vpow.pop %v2077
      %v2079 = vmul.f32 %v2036, 1.442695
      %v2080 = vpow.pop %v2079
      %v2081 = vmul.f32 %v2037, 1.442695
      %v2082 = vpow.pop %v2081
      %v2083 = vmul.f32 %v2038, 1.442695
      %v2084 = vpow.pop %v2083
      %v2085 = vmul.f32 %v2039, 1.442695
      %v2086 = vpow.pop %v2085
      %v2087 = vmul.f32 %v2040, 1.442695
      %v2088 = vpow.pop %v2087
      %v2089 = vmul.f32 %v2041, 1.442695
      %v2090 = vpow.pop %v2089
      %v2091 = vmul.f32 %v2042, 1.442695
      %v2092 = vpow.pop %v2091
      %v2093 = vmul.f32 %v2043, 1.442695
      %v2094 = vpow.pop %v2093
      %v2095 = vmul.f32 %v2044, 1.442695
      %v2096 = vpow.pop %v2095
      %v2097 = vadd.f32 %v2046, 1.0
      %v2098 = vadd.f32 %v2048, 1.0
      %v2099 = vadd.f32 %v2050, 1.0
      %v2100 = vadd.f32 %v2052, 1.0
      %v2101 = vadd.f32 %v2054, 1.0
      %v2102 = vadd.f32 %v2056, 1.0
      %v2103 = vadd.f32 %v2058, 1.0
      %v2104 = vadd.f32 %v2060, 1.0
      %v2105 = vadd.f32 %v2062, 1.0
      %v2106 = vadd.f32 %v2064, 1.0
      %v2107 = vadd.f32 %v2066, 1.0
      %v2108 = vadd.f32 %v2068, 1.0
      %v2109 = vadd.f32 %v2070, 1.0
      %v2110 = vadd.f32 %v2072, 1.0
      %v2111 = vadd.f32 %v2074, 1.0
      %v2112 = vadd.f32 %v2076, 1.0
      %v2113 = vadd.f32 %v2078, 1.0
      %v2114 = vadd.f32 %v2080, 1.0
      %v2115 = vadd.f32 %v2082, 1.0
      %v2116 = vadd.f32 %v2084, 1.0
      %v2117 = vadd.f32 %v2086, 1.0
      %v2118 = vadd.f32 %v2088, 1.0
      %v2119 = vadd.f32 %v2090, 1.0
      %v2120 = vadd.f32 %v2092, 1.0
      %v2121 = vadd.f32 %v2094, 1.0
      %v2122 = vadd.f32 %v2096, 1.0
      %v2123 = vrcp.pop %v2097
      %v2124 = vmul.f32 %v2097, %v2123
      %v2125 = vsub.f32 1.0, %v2124
      %v2126 = vmul.f32 %v2123, %v2125
      %v2127 = vadd.f32 %v2123, %v2126
      %vm2128 = vweird.f32 %v2097
      %vm2129 = vweird.f32 %v2123
      %vm2130 = vmor %vm2128, %vm2129
      %v2131 = vsel %vm2130, %v2123, %v2127
      %v2132 = vand.u32 2147483647, %v2097
      %vm2133 = vcmp.eq.f32.partialorder %v2132, 8.507059e+37
      %v2134 = vand.u32 %v2097, 2147483648
      %v2135 = vor.u32 1.1754944e-38, %v2134
      %v2136 = vsel %vm2133, %v2135, %v2131
      %v2137 = vmul.f32 1.0, %v2136
      %v2138 = vrcp.pop %v2098
      %v2139 = vmul.f32 %v2098, %v2138
      %v2140 = vsub.f32 1.0, %v2139
      %v2141 = vmul.f32 %v2138, %v2140
      %v2142 = vadd.f32 %v2138, %v2141
      %vm2143 = vweird.f32 %v2098
      %vm2144 = vweird.f32 %v2138
      %vm2145 = vmor %vm2143, %vm2144
      %v2146 = vsel %vm2145, %v2138, %v2142
      %v2147 = vand.u32 2147483647, %v2098
      %vm2148 = vcmp.eq.f32.partialorder %v2147, 8.507059e+37
      %v2149 = vand.u32 %v2098, 2147483648
      %v2150 = vor.u32 1.1754944e-38, %v2149
      %v2151 = vsel %vm2148, %v2150, %v2146
      %v2152 = vmul.f32 1.0, %v2151
      %v2153 = vrcp.pop %v2099
      %v2154 = vmul.f32 %v2099, %v2153
      %v2155 = vsub.f32 1.0, %v2154
      %v2156 = vmul.f32 %v2153, %v2155
      %v2157 = vadd.f32 %v2153, %v2156
      %vm2158 = vweird.f32 %v2099
      %vm2159 = vweird.f32 %v2153
      %vm2160 = vmor %vm2158, %vm2159
      %v2161 = vsel %vm2160, %v2153, %v2157
      %v2162 = vand.u32 2147483647, %v2099
      %vm2163 = vcmp.eq.f32.partialorder %v2162, 8.507059e+37
      %v2164 = vand.u32 %v2099, 2147483648
      %v2165 = vor.u32 1.1754944e-38, %v2164
      %v2166 = vsel %vm2163, %v2165, %v2161
      %v2167 = vmul.f32 1.0, %v2166
      %v2168 = vrcp.pop %v2100
      %v2169 = vmul.f32 %v2100, %v2168
      %v2170 = vsub.f32 1.0, %v2169
      %v2171 = vmul.f32 %v2168, %v2170
      %v2172 = vadd.f32 %v2168, %v2171
      %vm2173 = vweird.f32 %v2100
      %vm2174 = vweird.f32 %v2168
      %vm2175 = vmor %vm2173, %vm2174
      %v2176 = vsel %vm2175, %v2168, %v2172
      %v2177 = vand.u32 2147483647, %v2100
      %vm2178 = vcmp.eq.f32.partialorder %v2177, 8.507059e+37
      %v2179 = vand.u32 %v2100, 2147483648
      %v2180 = vor.u32 1.1754944e-38, %v2179
      %v2181 = vsel %vm2178, %v2180, %v2176
      %v2182 = vmul.f32 1.0, %v2181
      %v2183 = vrcp.pop %v2101
      %v2184 = vmul.f32 %v2101, %v2183
      %v2185 = vsub.f32 1.0, %v2184
      %v2186 = vmul.f32 %v2183, %v2185
      %v2187 = vadd.f32 %v2183, %v2186
      %vm2188 = vweird.f32 %v2101
      %vm2189 = vweird.f32 %v2183
      %vm2190 = vmor %vm2188, %vm2189
      %v2191 = vsel %vm2190, %v2183, %v2187
      %v2192 = vand.u32 2147483647, %v2101
      %vm2193 = vcmp.eq.f32.partialorder %v2192, 8.507059e+37
      %v2194 = vand.u32 %v2101, 2147483648
      %v2195 = vor.u32 1.1754944e-38, %v2194
      %v2196 = vsel %vm2193, %v2195, %v2191
      %v2197 = vmul.f32 1.0, %v2196
      %v2198 = vrcp.pop %v2102
      %v2199 = vmul.f32 %v2102, %v2198
      %v2200 = vsub.f32 1.0, %v2199
      %v2201 = vmul.f32 %v2198, %v2200
      %v2202 = vadd.f32 %v2198, %v2201
      %vm2203 = vweird.f32 %v2102
      %vm2204 = vweird.f32 %v2198
      %vm2205 = vmor %vm2203, %vm2204
      %v2206 = vsel %vm2205, %v2198, %v2202
      %v2207 = vand.u32 2147483647, %v2102
      %vm2208 = vcmp.eq.f32.partialorder %v2207, 8.507059e+37
      %v2209 = vand.u32 %v2102, 2147483648
      %v2210 = vor.u32 1.1754944e-38, %v2209
      %v2211 = vsel %vm2208, %v2210, %v2206
      %v2212 = vmul.f32 1.0, %v2211
      %v2213 = vrcp.pop %v2103
      %v2214 = vmul.f32 %v2103, %v2213
      %v2215 = vsub.f32 1.0, %v2214
      %v2216 = vmul.f32 %v2213, %v2215
      %v2217 = vadd.f32 %v2213, %v2216
      %vm2218 = vweird.f32 %v2103
      %vm2219 = vweird.f32 %v2213
      %vm2220 = vmor %vm2218, %vm2219
      %v2221 = vsel %vm2220, %v2213, %v2217
      %v2222 = vand.u32 2147483647, %v2103
      %vm2223 = vcmp.eq.f32.partialorder %v2222, 8.507059e+37
      %v2224 = vand.u32 %v2103, 2147483648
      %v2225 = vor.u32 1.1754944e-38, %v2224
      %v2226 = vsel %vm2223, %v2225, %v2221
      %v2227 = vmul.f32 1.0, %v2226
      %v2228 = vrcp.pop %v2104
      %v2229 = vmul.f32 %v2104, %v2228
      %v2230 = vsub.f32 1.0, %v2229
      %v2231 = vmul.f32 %v2228, %v2230
      %v2232 = vadd.f32 %v2228, %v2231
      %vm2233 = vweird.f32 %v2104
      %vm2234 = vweird.f32 %v2228
      %vm2235 = vmor %vm2233, %vm2234
      %v2236 = vsel %vm2235, %v2228, %v2232
      %v2237 = vand.u32 2147483647, %v2104
      %vm2238 = vcmp.eq.f32.partialorder %v2237, 8.507059e+37
      %v2239 = vand.u32 %v2104, 2147483648
      %v2240 = vor.u32 1.1754944e-38, %v2239
      %v2241 = vsel %vm2238, %v2240, %v2236
      %v2242 = vmul.f32 1.0, %v2241
      %v2243 = vrcp.pop %v2105
      %v2244 = vmul.f32 %v2105, %v2243
      %v2245 = vsub.f32 1.0, %v2244
      %v2246 = vmul.f32 %v2243, %v2245
      %v2247 = vadd.f32 %v2243, %v2246
      %vm2248 = vweird.f32 %v2105
      %vm2249 = vweird.f32 %v2243
      %vm2250 = vmor %vm2248, %vm2249
      %v2251 = vsel %vm2250, %v2243, %v2247
      %v2252 = vand.u32 2147483647, %v2105
      %vm2253 = vcmp.eq.f32.partialorder %v2252, 8.507059e+37
      %v2254 = vand.u32 %v2105, 2147483648
      %v2255 = vor.u32 1.1754944e-38, %v2254
      %v2256 = vsel %vm2253, %v2255, %v2251
      %v2257 = vmul.f32 1.0, %v2256
      %v2258 = vrcp.pop %v2106
      %v2259 = vmul.f32 %v2106, %v2258
      %v2260 = vsub.f32 1.0, %v2259
      %v2261 = vmul.f32 %v2258, %v2260
      %v2262 = vadd.f32 %v2258, %v2261
      %vm2263 = vweird.f32 %v2106
      %vm2264 = vweird.f32 %v2258
      %vm2265 = vmor %vm2263, %vm2264
      %v2266 = vsel %vm2265, %v2258, %v2262
      %v2267 = vand.u32 2147483647, %v2106
      %vm2268 = vcmp.eq.f32.partialorder %v2267, 8.507059e+37
      %v2269 = vand.u32 %v2106, 2147483648
      %v2270 = vor.u32 1.1754944e-38, %v2269
      %v2271 = vsel %vm2268, %v2270, %v2266
      %v2272 = vmul.f32 1.0, %v2271
      %v2273 = vrcp.pop %v2107
      %v2274 = vmul.f32 %v2107, %v2273
      %v2275 = vsub.f32 1.0, %v2274
      %v2276 = vmul.f32 %v2273, %v2275
      %v2277 = vadd.f32 %v2273, %v2276
      %vm2278 = vweird.f32 %v2107
      %vm2279 = vweird.f32 %v2273
      %vm2280 = vmor %vm2278, %vm2279
      %v2281 = vsel %vm2280, %v2273, %v2277
      %v2282 = vand.u32 2147483647, %v2107
      %vm2283 = vcmp.eq.f32.partialorder %v2282, 8.507059e+37
      %v2284 = vand.u32 %v2107, 2147483648
      %v2285 = vor.u32 1.1754944e-38, %v2284
      %v2286 = vsel %vm2283, %v2285, %v2281
      %v2287 = vmul.f32 1.0, %v2286
      %v2288 = vrcp.pop %v2108
      %v2289 = vmul.f32 %v2108, %v2288
      %v2290 = vsub.f32 1.0, %v2289
      %v2291 = vmul.f32 %v2288, %v2290
      %v2292 = vadd.f32 %v2288, %v2291
      %vm2293 = vweird.f32 %v2108
      %vm2294 = vweird.f32 %v2288
      %vm2295 = vmor %vm2293, %vm2294
      %v2296 = vsel %vm2295, %v2288, %v2292
      %v2297 = vand.u32 2147483647, %v2108
      %vm2298 = vcmp.eq.f32.partialorder %v2297, 8.507059e+37
      %v2299 = vand.u32 %v2108, 2147483648
      %v2300 = vor.u32 1.1754944e-38, %v2299
      %v2301 = vsel %vm2298, %v2300, %v2296
      %v2302 = vmul.f32 1.0, %v2301
      %v2303 = vrcp.pop %v2109
      %v2304 = vmul.f32 %v2109, %v2303
      %v2305 = vsub.f32 1.0, %v2304
      %v2306 = vmul.f32 %v2303, %v2305
      %v2307 = vadd.f32 %v2303, %v2306
      %vm2308 = vweird.f32 %v2109
      %vm2309 = vweird.f32 %v2303
      %vm2310 = vmor %vm2308, %vm2309
      %v2311 = vsel %vm2310, %v2303, %v2307
      %v2312 = vand.u32 2147483647, %v2109
      %vm2313 = vcmp.eq.f32.partialorder %v2312, 8.507059e+37
      %v2314 = vand.u32 %v2109, 2147483648
      %v2315 = vor.u32 1.1754944e-38, %v2314
      %v2316 = vsel %vm2313, %v2315, %v2311
      %v2317 = vmul.f32 1.0, %v2316
      %v2318 = vrcp.pop %v2110
      %v2319 = vmul.f32 %v2110, %v2318
      %v2320 = vsub.f32 1.0, %v2319
      %v2321 = vmul.f32 %v2318, %v2320
      %v2322 = vadd.f32 %v2318, %v2321
      %vm2323 = vweird.f32 %v2110
      %vm2324 = vweird.f32 %v2318
      %vm2325 = vmor %vm2323, %vm2324
      %v2326 = vsel %vm2325, %v2318, %v2322
      %v2327 = vand.u32 2147483647, %v2110
      %vm2328 = vcmp.eq.f32.partialorder %v2327, 8.507059e+37
      %v2329 = vand.u32 %v2110, 2147483648
      %v2330 = vor.u32 1.1754944e-38, %v2329
      %v2331 = vsel %vm2328, %v2330, %v2326
      %v2332 = vmul.f32 1.0, %v2331
      %v2333 = vrcp.pop %v2111
      %v2334 = vmul.f32 %v2111, %v2333
      %v2335 = vsub.f32 1.0, %v2334
      %v2336 = vmul.f32 %v2333, %v2335
      %v2337 = vadd.f32 %v2333, %v2336
      %vm2338 = vweird.f32 %v2111
      %vm2339 = vweird.f32 %v2333
      %vm2340 = vmor %vm2338, %vm2339
      %v2341 = vsel %vm2340, %v2333, %v2337
      %v2342 = vand.u32 2147483647, %v2111
      %vm2343 = vcmp.eq.f32.partialorder %v2342, 8.507059e+37
      %v2344 = vand.u32 %v2111, 2147483648
      %v2345 = vor.u32 1.1754944e-38, %v2344
      %v2346 = vsel %vm2343, %v2345, %v2341
      %v2347 = vmul.f32 1.0, %v2346
      %v2348 = vrcp.pop %v2112
      %v2349 = vmul.f32 %v2112, %v2348
      %v2350 = vsub.f32 1.0, %v2349
      %v2351 = vmul.f32 %v2348, %v2350
      %v2352 = vadd.f32 %v2348, %v2351
      %vm2353 = vweird.f32 %v2112
      %vm2354 = vweird.f32 %v2348
      %vm2355 = vmor %vm2353, %vm2354
      %v2356 = vsel %vm2355, %v2348, %v2352
      %v2357 = vand.u32 2147483647, %v2112
      %vm2358 = vcmp.eq.f32.partialorder %v2357, 8.507059e+37
      %v2359 = vand.u32 %v2112, 2147483648
      %v2360 = vor.u32 1.1754944e-38, %v2359
      %v2361 = vsel %vm2358, %v2360, %v2356
      %v2362 = vmul.f32 1.0, %v2361
      %v2363 = vrcp.pop %v2113
      %v2364 = vmul.f32 %v2113, %v2363
      %v2365 = vsub.f32 1.0, %v2364
      %v2366 = vmul.f32 %v2363, %v2365
      %v2367 = vadd.f32 %v2363, %v2366
      %vm2368 = vweird.f32 %v2113
      %vm2369 = vweird.f32 %v2363
      %vm2370 = vmor %vm2368, %vm2369
      %v2371 = vsel %vm2370, %v2363, %v2367
      %v2372 = vand.u32 2147483647, %v2113
      %vm2373 = vcmp.eq.f32.partialorder %v2372, 8.507059e+37
      %v2374 = vand.u32 %v2113, 2147483648
      %v2375 = vor.u32 1.1754944e-38, %v2374
      %v2376 = vsel %vm2373, %v2375, %v2371
      %v2377 = vmul.f32 1.0, %v2376
      %v2378 = vrcp.pop %v2114
      %v2379 = vmul.f32 %v2114, %v2378
      %v2380 = vsub.f32 1.0, %v2379
      %v2381 = vmul.f32 %v2378, %v2380
      %v2382 = vadd.f32 %v2378, %v2381
      %vm2383 = vweird.f32 %v2114
      %vm2384 = vweird.f32 %v2378
      %vm2385 = vmor %vm2383, %vm2384
      %v2386 = vsel %vm2385, %v2378, %v2382
      %v2387 = vand.u32 2147483647, %v2114
      %vm2388 = vcmp.eq.f32.partialorder %v2387, 8.507059e+37
      %v2389 = vand.u32 %v2114, 2147483648
      %v2390 = vor.u32 1.1754944e-38, %v2389
      %v2391 = vsel %vm2388, %v2390, %v2386
      %v2392 = vmul.f32 1.0, %v2391
      %v2393 = vrcp.pop %v2115
      %v2394 = vmul.f32 %v2115, %v2393
      %v2395 = vsub.f32 1.0, %v2394
      %v2396 = vmul.f32 %v2393, %v2395
      %v2397 = vadd.f32 %v2393, %v2396
      %vm2398 = vweird.f32 %v2115
      %vm2399 = vweird.f32 %v2393
      %vm2400 = vmor %vm2398, %vm2399
      %v2401 = vsel %vm2400, %v2393, %v2397
      %v2402 = vand.u32 2147483647, %v2115
      %vm2403 = vcmp.eq.f32.partialorder %v2402, 8.507059e+37
      %v2404 = vand.u32 %v2115, 2147483648
      %v2405 = vor.u32 1.1754944e-38, %v2404
      %v2406 = vsel %vm2403, %v2405, %v2401
      %v2407 = vmul.f32 1.0, %v2406
      %v2408 = vrcp.pop %v2116
      %v2409 = vmul.f32 %v2116, %v2408
      %v2410 = vsub.f32 1.0, %v2409
      %v2411 = vmul.f32 %v2408, %v2410
      %v2412 = vadd.f32 %v2408, %v2411
      %vm2413 = vweird.f32 %v2116
      %vm2414 = vweird.f32 %v2408
      %vm2415 = vmor %vm2413, %vm2414
      %v2416 = vsel %vm2415, %v2408, %v2412
      %v2417 = vand.u32 2147483647, %v2116
      %vm2418 = vcmp.eq.f32.partialorder %v2417, 8.507059e+37
      %v2419 = vand.u32 %v2116, 2147483648
      %v2420 = vor.u32 1.1754944e-38, %v2419
      %v2421 = vsel %vm2418, %v2420, %v2416
      %v2422 = vmul.f32 1.0, %v2421
      %v2423 = vrcp.pop %v2117
      %v2424 = vmul.f32 %v2117, %v2423
      %v2425 = vsub.f32 1.0, %v2424
      %v2426 = vmul.f32 %v2423, %v2425
      %v2427 = vadd.f32 %v2423, %v2426
      %vm2428 = vweird.f32 %v2117
      %vm2429 = vweird.f32 %v2423
      %vm2430 = vmor %vm2428, %vm2429
      %v2431 = vsel %vm2430, %v2423, %v2427
      %v2432 = vand.u32 2147483647, %v2117
      %vm2433 = vcmp.eq.f32.partialorder %v2432, 8.507059e+37
      %v2434 = vand.u32 %v2117, 2147483648
      %v2435 = vor.u32 1.1754944e-38, %v2434
      %v2436 = vsel %vm2433, %v2435, %v2431
      %v2437 = vmul.f32 1.0, %v2436
      %v2438 = vrcp.pop %v2118
      %v2439 = vmul.f32 %v2118, %v2438
      %v2440 = vsub.f32 1.0, %v2439
      %v2441 = vmul.f32 %v2438, %v2440
      %v2442 = vadd.f32 %v2438, %v2441
      %vm2443 = vweird.f32 %v2118
      %vm2444 = vweird.f32 %v2438
      %vm2445 = vmor %vm2443, %vm2444
      %v2446 = vsel %vm2445, %v2438, %v2442
      %v2447 = vand.u32 2147483647, %v2118
      %vm2448 = vcmp.eq.f32.partialorder %v2447, 8.507059e+37
      %v2449 = vand.u32 %v2118, 2147483648
      %v2450 = vor.u32 1.1754944e-38, %v2449
      %v2451 = vsel %vm2448, %v2450, %v2446
      %v2452 = vmul.f32 1.0, %v2451
      %v2453 = vrcp.pop %v2119
      %v2454 = vmul.f32 %v2119, %v2453
      %v2455 = vsub.f32 1.0, %v2454
      %v2456 = vmul.f32 %v2453, %v2455
      %v2457 = vadd.f32 %v2453, %v2456
      %vm2458 = vweird.f32 %v2119
      %vm2459 = vweird.f32 %v2453
      %vm2460 = vmor %vm2458, %vm2459
      %v2461 = vsel %vm2460, %v2453, %v2457
      %v2462 = vand.u32 2147483647, %v2119
      %vm2463 = vcmp.eq.f32.partialorder %v2462, 8.507059e+37
      %v2464 = vand.u32 %v2119, 2147483648
      %v2465 = vor.u32 1.1754944e-38, %v2464
      %v2466 = vsel %vm2463, %v2465, %v2461
      %v2467 = vmul.f32 1.0, %v2466
      %v2468 = vrcp.pop %v2120
      %v2469 = vmul.f32 %v2120, %v2468
      %v2470 = vsub.f32 1.0, %v2469
      %v2471 = vmul.f32 %v2468, %v2470
      %v2472 = vadd.f32 %v2468, %v2471
      %vm2473 = vweird.f32 %v2120
      %vm2474 = vweird.f32 %v2468
      %vm2475 = vmor %vm2473, %vm2474
      %v2476 = vsel %vm2475, %v2468, %v2472
      %v2477 = vand.u32 2147483647, %v2120
      %vm2478 = vcmp.eq.f32.partialorder %v2477, 8.507059e+37
      %v2479 = vand.u32 %v2120, 2147483648
      %v2480 = vor.u32 1.1754944e-38, %v2479
      %v2481 = vsel %vm2478, %v2480, %v2476
      %v2482 = vmul.f32 1.0, %v2481
      %v2483 = vrcp.pop %v2121
      %v2484 = vmul.f32 %v2121, %v2483
      %v2485 = vsub.f32 1.0, %v2484
      %v2486 = vmul.f32 %v2483, %v2485
      %v2487 = vadd.f32 %v2483, %v2486
      %vm2488 = vweird.f32 %v2121
      %vm2489 = vweird.f32 %v2483
      %vm2490 = vmor %vm2488, %vm2489
      %v2491 = vsel %vm2490, %v2483, %v2487
      %v2492 = vand.u32 2147483647, %v2121
      %vm2493 = vcmp.eq.f32.partialorder %v2492, 8.507059e+37
      %v2494 = vand.u32 %v2121, 2147483648
      %v2495 = vor.u32 1.1754944e-38, %v2494
      %v2496 = vsel %vm2493, %v2495, %v2491
      %v2497 = vmul.f32 1.0, %v2496
      %v2498 = vrcp.pop %v2122
      %v2499 = vmul.f32 %v2122, %v2498
      %v2500 = vsub.f32 1.0, %v2499
      %v2501 = vmul.f32 %v2498, %v2500
      %v2502 = vadd.f32 %v2498, %v2501
      %vm2503 = vweird.f32 %v2122
      %vm2504 = vweird.f32 %v2498
      %vm2505 = vmor %vm2503, %vm2504
      %v2506 = vsel %vm2505, %v2498, %v2502
      %v2507 = vand.u32 2147483647, %v2122
      %vm2508 = vcmp.eq.f32.partialorder %v2507, 8.507059e+37
      %v2509 = vand.u32 %v2122, 2147483648
      %v2510 = vor.u32 1.1754944e-38, %v2509
      %v2511 = vsel %vm2508, %v2510, %v2506
      %v2512 = vmul.f32 1.0, %v2511
      %v2513 = vmul.f32 %v1943, %v2137
      %v2514 = vmul.f32 %v1986, %v2152
      %v2515 = vmul.f32 %v1945, %v2167
      %v2516 = vmul.f32 %v1988, %v2182
      %v2517 = vmul.f32 %v1948, %v2197
      %v2518 = vmul.f32 %v1991, %v2212
      %v2519 = vmul.f32 %v1950, %v2227
      %v2520 = vmul.f32 %v1993, %v2242
      %v2521 = vmul.f32 %v1953, %v2257
      %v2522 = vmul.f32 %v1996, %v2272
      %v2523 = vmul.f32 %v1955, %v2287
      %v2524 = vmul.f32 %v1998, %v2302
      %v2525 = vmul.f32 %v1958, %v2317
      %v2526 = vmul.f32 %v2001, %v2332
      %v2527 = vmul.f32 %v1960, %v2347
      %v2528 = vmul.f32 %v2003, %v2362
      %v2529 = vmul.f32 %v1963, %v2377
      %v2530 = vmul.f32 %v2006, %v2392
      %v2531 = vmul.f32 %v1965, %v2407
      %v2532 = vmul.f32 %v2008, %v2422
      %v2533 = vmul.f32 %v1968, %v2437
      %v2534 = vmul.f32 %v2011, %v2452
      %v2535 = vmul.f32 %v1970, %v2467
      %v2536 = vmul.f32 %v2013, %v2482
      %v2537 = vmul.f32 %v1973, %v2497
      %v2538 = vmul.f32 %v2016, %v2512
      %v2539 = vpack.c.bf16 %v2515, %v2513
      %v2540 = vpack.c.bf16 %v2516, %v2514
      %v2541 = vpack.c.bf16 %v2519, %v2517
      %v2542 = vpack.c.bf16 %v2520, %v2518
      %v2543 = vpack.c.bf16 %v2523, %v2521
      %v2544 = vpack.c.bf16 %v2524, %v2522
      %v2545 = vpack.c.bf16 %v2527, %v2525
      %v2546 = vpack.c.bf16 %v2528, %v2526
      %v2547 = vpack.c.bf16 %v2531, %v2529
      %v2548 = vpack.c.bf16 %v2532, %v2530
      %v2549 = vpack.c.bf16 %v2535, %v2533
      %v2550 = vpack.c.bf16 %v2536, %v2534
      %v2551 = vpack.c.bf16 %v2537, %v2537
      %v2552 = vpack.c.bf16 %v2538, %v2538
      %v2554 = vsel %vm1640, %v2551, 0
      %v2557 = vsel %vm1640, %v2552, 0
      %2559 = vmatpush.bf16.msra.mxu0 0
      %2560 = vmatpush.bf16.msra.mxu0 %v2554
      %2561 = vmatpush.bf16.msra.mxu0 %v2549
      %2562 = vmatpush.bf16.msra.mxu0 %v2547
      %2563 = vmatpush.bf16.msra.mxu0 %v2545
      %2564 = vmatpush.bf16.msra.mxu0 %v2543
      %2565 = vmatpush.bf16.msra.mxu0 %v2541
      %2566 = vmatpush.bf16.msra.mxu0 %v2539
      %2567 = vmatmul.bf16.gmra.mxu0 %v1638
      %v2568 = vpop.f32.mrf.mxu0
      %v2569 = vadd.f32 0.0, %v2568
      %v2570 = vpop.f32.mrf.mxu0
      %2571 = vdwg.mxu0
      %2572 = vmatpush.bf16.msra.mxu0 0
      %2573 = vmatpush.bf16.msra.mxu0 %v2557
      %2574 = vmatpush.bf16.msra.mxu0 %v2550
      %2575 = vmatpush.bf16.msra.mxu0 %v2548
      %2576 = vmatpush.bf16.msra.mxu0 %v2546
      %2577 = vmatpush.bf16.msra.mxu0 %v2544
      %2578 = vmatpush.bf16.msra.mxu0 %v2542
      %2579 = vmatpush.bf16.msra.mxu0 %v2540
      %2580 = vmatmul.bf16.gmra.mxu0 %v1638
      %v2581 = vpop.f32.mrf.mxu0
      %v2582 = vadd.f32 0.0, %v2581
      %v2583 = vpop.f32.mrf.mxu0
      %2584 = vdwg.mxu0
      %v2585 = vpack.c.bf16 %v2569, %v2569
      %v2586 = vpack.c.bf16 %v2582, %v2582
      %v2587 = vld [vmem:[%s13] sm:$0xf]
      %v2588 = vld [vmem:[%s13 + $0x4] sm:$0xf]
      %v2589 = vld [vmem:[%s13 + $0x8] sm:$0xf]
      %v2590 = vld [vmem:[%s13 + $0xc] sm:$0xf]
      %v2591 = vld [vmem:[%s13 + $0x10] sm:$0xf]
      %v2592 = vld [vmem:[%s13 + $0x14] sm:$0xf]
      %v2593 = vld [vmem:[%s13 + $0x18] sm:$0xf]
      %v2594 = vld [vmem:[%s13 + $0x1c] sm:$0xf]
      %v2595 = vld [vmem:[%s13 + $0x20] sm:$0xf]
      %v2596 = vld [vmem:[%s13 + $0x24] sm:$0xf]
      %v2597 = vld [vmem:[%s13 + $0x28] sm:$0xf]
      %v2598 = vld [vmem:[%s13 + $0x2c] sm:$0xf]
      %v2599 = vld [vmem:[%s13 + $0x30] sm:$0xf]
      %v2600 = vld [vmem:[%s13 + $0x34] sm:$0xf]
      %v2601 = vld [vmem:[%s13 + $0x38] sm:$0xf]
      %v2602 = vld [vmem:[%s13 + $0x3c] sm:$0xf]
      %v2603 = vld [vmem:[%s13 + $0x40] sm:$0xf]
      %v2604 = vld [vmem:[%s13 + $0x44] sm:$0xf]
      %v2605 = vld [vmem:[%s13 + $0x48] sm:$0xf]
      %v2606 = vld [vmem:[%s13 + $0x4c] sm:$0xf]
      %v2607 = vld [vmem:[%s13 + $0x50] sm:$0xf]
      %v2608 = vld [vmem:[%s13 + $0x54] sm:$0xf]
      %v2609 = vld [vmem:[%s13 + $0x58] sm:$0xf]
      %v2610 = vld [vmem:[%s13 + $0x5c] sm:$0xf]
      %v2611 = vld [vmem:[%s13 + $0x60] sm:$0xf]
      %v2612 = vld [vmem:[%s13 + $0x64] sm:$0xf]
      %v2613 = vld [vmem:[%s13 + $0x68] sm:$0xf]
      %v2614 = vld [vmem:[%s13 + $0x6c] sm:$0xf]
      %v2615 = vld [vmem:[%s13 + $0x70] sm:$0xf]
      %v2616 = vld [vmem:[%s13 + $0x74] sm:$0xf]
      %v2617 = vld [vmem:[%s13 + $0x78] sm:$0xf]
      %v2618 = vld [vmem:[%s13 + $0x7c] sm:$0xf]
      %v2619 = vld [vmem:[%s14] sm:$0x1]
      %v2652 = vunpack.c.l.b16 %v2587
      %v2653 = vunpack.c.l.b16 %v2588
      %v2654 = vunpack.c.l.b16 %v2589
      %v2655 = vunpack.c.l.b16 %v2590
      %v2656 = vunpack.c.l.b16 %v2591
      %v2657 = vunpack.c.l.b16 %v2592
      %v2658 = vunpack.c.l.b16 %v2593
      %v2659 = vunpack.c.l.b16 %v2594
      %v2660 = vunpack.c.l.b16 %v2595
      %v2661 = vunpack.c.l.b16 %v2596
      %v2662 = vunpack.c.l.b16 %v2597
      %v2663 = vunpack.c.l.b16 %v2598
      %v2664 = vunpack.c.l.b16 %v2599
      %v2665 = vunpack.c.l.b16 %v2600
      %v2666 = vunpack.c.l.b16 %v2601
      %v2667 = vunpack.c.l.b16 %v2602
      %v2668 = vunpack.c.l.b16 %v2603
      %v2669 = vunpack.c.l.b16 %v2604
      %v2670 = vunpack.c.l.b16 %v2605
      %v2671 = vunpack.c.l.b16 %v2606
      %v2672 = vunpack.c.l.b16 %v2607
      %v2673 = vunpack.c.l.b16 %v2608
      %v2674 = vunpack.c.l.b16 %v2609
      %v2675 = vunpack.c.l.b16 %v2610
      %v2676 = vunpack.c.l.b16 %v2611
      %v2677 = vunpack.c.l.b16 %v2612
      %v2678 = vunpack.c.l.b16 %v2613
      %v2679 = vunpack.c.l.b16 %v2614
      %v2680 = vunpack.c.l.b16 %v2615
      %v2681 = vunpack.c.l.b16 %v2616
      %v2682 = vunpack.c.l.b16 %v2617
      %v2683 = vunpack.c.l.b16 %v2618
      %v2684 = vpack.c.b16 %v2653, %v2652
      %v2685 = vpack.c.b16 %v2655, %v2654
      %v2686 = vpack.c.b16 %v2657, %v2656
      %v2687 = vpack.c.b16 %v2659, %v2658
      %v2688 = vpack.c.b16 %v2661, %v2660
      %v2689 = vpack.c.b16 %v2663, %v2662
      %v2690 = vpack.c.b16 %v2665, %v2664
      %v2691 = vpack.c.b16 %v2667, %v2666
      %v2692 = vpack.c.b16 %v2669, %v2668
      %v2693 = vpack.c.b16 %v2671, %v2670
      %v2694 = vpack.c.b16 %v2673, %v2672
      %v2695 = vpack.c.b16 %v2675, %v2674
      %v2696 = vpack.c.b16 %v2677, %v2676
      %v2697 = vpack.c.b16 %v2679, %v2678
      %v2698 = vpack.c.b16 %v2681, %v2680
      %v2699 = vpack.c.b16 %v2683, %v2682
      %2716 = vmatpush.bf16.msra.mxu0 %v2691
      %2717 = vmatpush.bf16.msra.mxu0 %v2690
      %2718 = vmatpush.bf16.msra.mxu0 %v2689
      %2719 = vmatpush.bf16.msra.mxu0 %v2688
      %2720 = vmatpush.bf16.msra.mxu0 %v2687
      %2721 = vmatpush.bf16.msra.mxu0 %v2686
      %2722 = vmatpush.bf16.msra.mxu0 %v2685
      %2723 = vmatpush.bf16.msra.mxu0 %v2684
      %2724 = vmatmul.bf16.gmra.mxu0 %v2585
      %v2725 = vpop.f32.mrf.mxu0
      %v2726 = vadd.f32 %v2619, %v2725
      %v2727 = vpop.f32.mrf.mxu0
      %2728 = vdwg.mxu0
      %2729 = vmatpush.bf16.msra.mxu0 %v2699
      %2730 = vmatpush.bf16.msra.mxu0 %v2698
      %2731 = vmatpush.bf16.msra.mxu0 %v2697
      %2732 = vmatpush.bf16.msra.mxu0 %v2696
      %2733 = vmatpush.bf16.msra.mxu0 %v2695
      %2734 = vmatpush.bf16.msra.mxu0 %v2694
      %2735 = vmatpush.bf16.msra.mxu0 %v2693
      %2736 = vmatpush.bf16.msra.mxu0 %v2692
      %2737 = vmatmul.bf16.gmra.mxu0 %v2586
      %v2738 = vpop.f32.mrf.mxu0
      %v2739 = vadd.f32 %v2726, %v2738
      %v2740 = vpop.f32.mrf.mxu0
      %2741 = vdwg.mxu0
      %2742 = vst [vmem:[%s490] sm:$0x1] %v2739
      %p2743 = scmp.lt.s32.totalorder %s26, 1
      %s2744 = scalar_select %p2743, %s26, 1
      %s2745 = scalar_lea.vmem %s15, %s2744
      // Predicated region
      $region81: #{detector_forward.1} parent=79 // pred_check
        %p2746 = pneg %p364
      $region82: #{detector_forward.1} parent=79 // pred_check_branch
        %2748 = sbr.rel (%p2746) target = $region84
      $region83: #{detector_forward.1} parent=79 // pred_region
        _
      $region84: #{detector_forward.1} parent=79 // pred_fallthru
        _
    $region80: #{detector_forward.1} parent=5 // pred_fallthru
      _
    %p2749 = scmp.le.s32.totalorder 2, %s21
    // Predicated region
    $region85: #{detector_forward.1} parent=5 // pred_check
      %p2750 = pneg %p2749
    $region86: #{detector_forward.1} parent=5 // pred_check_branch
      %2752 = sbr.rel (%p2750) target = $region88
    $region87: #{detector_forward.1} parent=5 // pred_region
      %s2753 = ssub.s32 %s21, 2
      // Predicated region
      $region89: #{detector_forward.1} parent=87 // pred_check
        %p2754 = pneg %p370
      $region90: #{detector_forward.1} parent=87 // pred_check_branch
        %2756 = sbr.rel (%p2754) target = $region92
      $region91: #{detector_forward.1} parent=87 // pred_region
        %p2757 = scmp.lt.s32.totalorder %s27, 1
        %s2758 = scalar_select %p2757, %s27, 1
        %s2759 = scalar_lea.vmem %s15, %s2758
      $region92: #{detector_forward.1} parent=87 // pred_fallthru
        _
    $region88: #{detector_forward.1} parent=5 // pred_fallthru
      _
  $region6: #{detector_forward.1} parent=0 // loop_footer
    %s25 = sadd.s32 1, %s21
  $region7: #{detector_forward.1} parent=0 // loop_footer_branch
    %20 = sbr.rel target = $region3
  $region8: #{detector_forward.1} parent=0 // loop_exit
    _

</llo_original>
